<compile_context>
chip_gen: v5e
topology: v5e:2x2
jax: 0.10.0
libtpu: 0.0.40
codegen_flags: <defaults>
</compile_context>

<pallas_src>
import functools

import jax
import jax.numpy as jnp
from jax.experimental import pallas as pl
from jax.experimental.pallas import tpu as pltpu


def _round_up(n, m):
    return ((n + m - 1) // m) * m


def _char_rnn_kernel(*refs, apply_dropout: bool):
    if apply_dropout:
        (x_ref, mask_ref, h0_ref, wih_t_ref, whh_t_ref, b_rnn_ref,
         wfc_t_ref, bfc_ref, logits_ref, h_last_ref, h_carry, act_scr) = refs
    else:
        (x_ref, h0_ref, wih_t_ref, whh_t_ref, b_rnn_ref,
         wfc_t_ref, bfc_ref, logits_ref, h_last_ref, h_carry, act_scr) = refs
        mask_ref = None

    tb, tt, hp = x_ref.shape          # (TILE_B, TILE_T, Hp)
    vp = wfc_t_ref.shape[1]
    c = pl.program_id(1)              # time-chunk index (sequential axis)

    @pl.when(c == 0)
    def _():
        h_carry[...] = h0_ref[...]    # reset carry at the start of each batch block

    # --- (1) batched, non-recurrent input projection for the whole chunk ---
    #     (TILE_B*TILE_T, H) @ (H, H): MXU-shaped M, bf16 in / f32 accumulate.
    x_flat = x_ref[...].reshape(tb * tt, hp)
    act_scr[...] = (
        jnp.dot(x_flat, wih_t_ref[...], preferred_element_type=jnp.float32)
        + b_rnn_ref[...]                       # fused b_ih + b_hh
    ).reshape(tb, tt, hp)

    # --- (2) sequential recurrence: only h@W_hh^T + tanh on the serial path ---
    whh_t = whh_t_ref[...]
    h = h_carry[...]
    for t in range(tt):                        # static unroll over the chunk
        h = jnp.tanh(
            act_scr[:, t, :]
            + jnp.dot(h.astype(whh_t.dtype), whh_t,
                      preferred_element_type=jnp.float32))
        act_scr[:, t, :] = h                   # overwrite pre-act with hidden state
    h_carry[...] = h
    h_last_ref[...] = h                        # pre-dropout h_T (nn.RNN semantics)

    # --- (3) batched dropout + output projection for the whole chunk ---
    fc_in = act_scr[...]
    if apply_dropout:
        fc_in = fc_in * mask_ref[...]          # inverted-dropout scales {0, 2}
    logits = (
        jnp.dot(fc_in.reshape(tb * tt, hp).astype(wfc_t_ref.dtype),
                wfc_t_ref[...], preferred_element_type=jnp.float32)
        + bfc_ref[...])
    logits_ref[...] = logits.reshape(tb, tt, vp)


def char_rnn_forward(x, params, h=None, training=True, dropout_key=None,
                     tile_t=32, tile_b=8):
    """Mirrors CharRNN.forward: returns (logits (B, T, V), h (1, B, H))."""
    B, T = x.shape
    H = params["w_hh"].shape[0]
    V = params["w_fc"].shape[0]
    Hp, Vp = _round_up(H, 128), _round_up(V, 128)

    assert T % 8 == 0, "sequence length must be a multiple of 8"
    if T % tile_t != 0 or tile_t % 8 != 0:
        tile_t = next(t for t in (64, 32, 16, 8) if T % t == 0)
    if B % tile_b != 0:
        tile_b = B                       # full-dim batch block is always legal
    nb, nc = B // tile_b, T // tile_t

    f32, bf16 = jnp.float32, jnp.bfloat16

    # Embedding gather (glue, plain JAX); batch-first layout kept throughout.
    emb = jnp.take(params["embedding"].astype(f32), x, axis=0)     # (B, T, H)
    if Hp != H:
        emb = jnp.pad(emb, ((0, 0), (0, 0), (0, Hp - H)))
    x_bf = emb.astype(bf16)

    def pad2(a, rows, cols):
        return jnp.pad(a.astype(f32), ((0, rows - a.shape[0]),
                                       (0, cols - a.shape[1])))

    wih_t = pad2(params["w_ih"].T, Hp, Hp).astype(bf16)
    whh_t = pad2(params["w_hh"].T, Hp, Hp).astype(bf16)
    wfc_t = pad2(params["w_fc"].T, Hp, Vp).astype(bf16)
    b_rnn = jnp.pad((params["b_ih"] + params["b_hh"]).astype(f32),
                    (0, Hp - H))[None, :]
    b_fc = jnp.pad(params["b_fc"].astype(f32), (0, Vp - V))[None, :]

    if h is None:
        h0 = jnp.zeros((B, Hp), f32)
    else:
        h0 = jnp.asarray(h, f32).reshape(B, H)
        if Hp != H:
            h0 = jnp.pad(h0, ((0, 0), (0, Hp - H)))

    in_arrays = [x_bf]
    in_specs = [pl.BlockSpec((tile_b, tile_t, Hp), lambda b, c: (b, c, 0))]
    if training:
        if dropout_key is None:
            dropout_key = jax.random.PRNGKey(0)
        # TODO(synk): dropout randomness comes from host-side jax.random, not
        # torch's RNG nor the in-kernel TPU PRNG.
        keep = jax.random.bernoulli(dropout_key, 0.5, (B, T, H))
        mask = keep.astype(bf16) * 2.0          # inverted dropout, p=0.5
        if Hp != H:
            mask = jnp.pad(mask, ((0, 0), (0, 0), (0, Hp - H)))
        in_arrays.append(mask)
        in_specs.append(pl.BlockSpec((tile_b, tile_t, Hp), lambda b, c: (b, c, 0)))

    in_arrays += [h0, wih_t, whh_t, b_rnn, wfc_t, b_fc]
    in_specs += [
        pl.BlockSpec((tile_b, Hp), lambda b, c: (b, 0)),   # h0
        pl.BlockSpec((Hp, Hp), lambda b, c: (0, 0)),       # W_ih^T
        pl.BlockSpec((Hp, Hp), lambda b, c: (0, 0)),       # W_hh^T
        pl.BlockSpec((1, Hp), lambda b, c: (0, 0)),        # b_ih + b_hh
        pl.BlockSpec((Hp, Vp), lambda b, c: (0, 0)),       # W_fc^T
        pl.BlockSpec((1, Vp), lambda b, c: (0, 0)),        # b_fc
    ]

    out_specs = [
        pl.BlockSpec((tile_b, tile_t, Vp), lambda b, c: (b, c, 0)),  # logits
        pl.BlockSpec((tile_b, Hp), lambda b, c: (b, 0)),             # final h
    ]
    out_shape = (jax.ShapeDtypeStruct((B, T, Vp), f32),
                 jax.ShapeDtypeStruct((B, Hp), f32))

    grid_spec = pltpu.PrefetchScalarGridSpec(
        num_scalar_prefetch=0,
        grid=(nb, nc),
        in_specs=in_specs,
        out_specs=out_specs,
        scratch_shapes=[
            pltpu.VMEM((tile_b, Hp), f32),            # carried hidden state
            pltpu.VMEM((tile_b, tile_t, Hp), f32),    # chunk pre-acts / hidden states
        ],
    )

    flops = 2 * B * T * Hp * (2 * Hp + Vp)
    bytes_accessed = int(sum(int(a.size) * a.dtype.itemsize for a in in_arrays)
                         + B * T * Vp * 4 + B * Hp * 4)
    cost = pl.CostEstimate(flops=flops, transcendentals=B * T * Hp,
                           bytes_accessed=bytes_accessed)

    kernel = functools.partial(_char_rnn_kernel, apply_dropout=training)

    logits_p, h_last = pl.pallas_call(
        kernel,
        out_shape=out_shape,
        grid_spec=grid_spec,
        compiler_params=pltpu.CompilerParams(
            dimension_semantics=("parallel", "arbitrary")),
        cost_estimate=cost,
    )(*in_arrays)

    logits = logits_p[:, :, :V]            # strip vocab padding
    h_out = h_last[:, :H][None, :, :]      # (1, B, H) pre-dropout h_T, like nn.RNN
    return logits, h_out


def _init_params(key, vocab_size, hidden_size):
    k = jax.random.split(key, 7)
    s = float(1.0 / (hidden_size ** 0.5))
    u = lambda kk, shape: jax.random.uniform(kk, shape, jnp.float32, -s, s)
    return {
        "embedding": jax.random.normal(k[0], (vocab_size, hidden_size), jnp.float32),
        "w_ih": u(k[1], (hidden_size, hidden_size)),
        "w_hh": u(k[2], (hidden_size, hidden_size)),
        "b_ih": u(k[3], (hidden_size,)),
        "b_hh": u(k[4], (hidden_size,)),
        "w_fc": u(k[5], (vocab_size, hidden_size)),
        "b_fc": u(k[6], (vocab_size,)),
    }


if __name__ == "__main__":
    B, T, H, V = 16, 48, 128, 96     # batch, seq, hidden, vocab (V exercises lane padding)
    key = jax.random.PRNGKey(0)
    kp, kx, kd = jax.random.split(key, 3)
    params = _init_params(kp, V, H)
    x = jax.random.randint(kx, (B, T), 0, V, dtype=jnp.int32)

    # training=True path (dropout active, as in the module's default forward)
    logits_tr, h_tr = char_rnn_forward(x, params, training=True,
                                       dropout_key=kd, tile_t=16)
    jax.block_until_ready((logits_tr, h_tr))
    assert logits_tr.shape == (B, T, V) and h_tr.shape == (1, B, H)

    # eval path (no dropout)
    logits_ev, h_ev = char_rnn_forward(x, params, training=False, tile_t=16)
    jax.block_until_ready((logits_ev, h_ev))

    # ---- pure-JAX reference with matching numerics (bf16 matmul in, f32 acc) ----
    bf16 = jnp.bfloat16
    emb = params["embedding"][x]                                    # (B, T, H)
    wih_t_b = params["w_ih"].T.astype(bf16)
    whh_t_b = params["w_hh"].T.astype(bf16)
    wfc_t_b = params["w_fc"].T.astype(bf16)
    b_rnn = params["b_ih"] + params["b_hh"]

    xp = jnp.einsum("bth,hk->btk", emb.astype(bf16), wih_t_b,
                    preferred_element_type=jnp.float32) + b_rnn

    def step(hprev, xp_t):
        hnew = jnp.tanh(xp_t + jnp.dot(hprev.astype(bf16), whh_t_b,
                                       preferred_element_type=jnp.float32))
        return hnew, hnew

    h_last_ref, hs_tm = jax.lax.scan(step, jnp.zeros((B, H), jnp.float32),
                                     jnp.transpose(xp, (1, 0, 2)))
    hs = jnp.transpose(hs_tm, (1, 0, 2))                            # (B, T, H)

    def fc(hin):
        return jnp.einsum("bth,hv->btv", hin.astype(bf16), wfc_t_b,
                          preferred_element_type=jnp.float32) + params["b_fc"]

    ref_logits_eval = fc(hs)
    keep = jax.random.bernoulli(kd, 0.5, (B, T, H))                 # same mask as kernel
    ref_logits_train = fc(hs * (keep.astype(bf16) * 2.0))

    tol = dict(atol=1e-2, rtol=1e-2)
    assert jnp.allclose(logits_ev, ref_logits_eval, **tol)
    assert jnp.allclose(h_ev[0], h_last_ref, **tol)
    assert jnp.allclose(logits_tr, ref_logits_train, **tol)
    assert jnp.allclose(h_tr, h_ev, **tol)   # returned hidden is pre-dropout in both

    print("KERNEL_OK")
</pallas_src>

<mosaic_0001>
module attributes {stable_mosaic.version = 11 : i64} {
  func.func @_char_rnn_kernel(%arg0: i32, %arg1: i32, %arg2: memref<8x16x128xbf16, #tpu.memory_space<vmem>>, %arg3: memref<8x16x128xbf16, #tpu.memory_space<vmem>>, %arg4: memref<8x128xf32, #tpu.memory_space<vmem>>, %arg5: memref<128x128xbf16, #tpu.memory_space<vmem>>, %arg6: memref<128x128xbf16, #tpu.memory_space<vmem>>, %arg7: memref<1x128xf32, #tpu.memory_space<vmem>>, %arg8: memref<128x128xbf16, #tpu.memory_space<vmem>>, %arg9: memref<1x128xf32, #tpu.memory_space<vmem>>, %arg10: memref<8x16x128xf32, #tpu.memory_space<vmem>>, %arg11: memref<8x128xf32, #tpu.memory_space<vmem>>, %arg12: memref<8x128xf32, #tpu.memory_space<vmem>>, %arg13: memref<8x16x128xf32, #tpu.memory_space<vmem>>) attributes {dimension_semantics = [#tpu.dimension_semantics<parallel>, #tpu.dimension_semantics<arbitrary>], iteration_bounds = array<i64: 2, 3>, scalar_prefetch = 0 : i64, scratch_operands = 2 : i64, tpu.core_type = #tpu.core_type<tc>, window_params = [{transform_indices = @transform_0, window_bounds = array<i64: 8, 16, 128>}, {transform_indices = @transform_1, window_bounds = array<i64: 8, 16, 128>}, {transform_indices = @transform_2, window_bounds = array<i64: 8, 128>}, {pipeline_mode = #tpu.pipeline_mode<synchronous>, transform_indices = @transform_3, window_bounds = array<i64: 128, 128>}, {pipeline_mode = #tpu.pipeline_mode<synchronous>, transform_indices = @transform_4, window_bounds = array<i64: 128, 128>}, {pipeline_mode = #tpu.pipeline_mode<synchronous>, transform_indices = @transform_5, window_bounds = array<i64: 1, 128>}, {pipeline_mode = #tpu.pipeline_mode<synchronous>, transform_indices = @transform_6, window_bounds = array<i64: 128, 128>}, {pipeline_mode = #tpu.pipeline_mode<synchronous>, transform_indices = @transform_7, window_bounds = array<i64: 1, 128>}, {transform_indices = @transform_8, window_bounds = array<i64: 8, 16, 128>}, {transform_indices = @transform_9, window_bounds = array<i64: 8, 128>}]} {
    %c0_i32 = arith.constant 0 : i32
    %0 = arith.cmpi eq, %arg1, %c0_i32 : i32
    %1 = arith.extui %0 : i1 to i32
    %c0_i32_0 = arith.constant 0 : i32
    %2 = arith.cmpi ne, %1, %c0_i32_0 : i32
    scf.if %2 {
      %c0_129 = arith.constant 0 : index
      %c0_130 = arith.constant 0 : index
      %173 = vector.load %arg4[%c0_129, %c0_130] : memref<8x128xf32, #tpu.memory_space<vmem>>, vector<8x128xf32>
      %c0_131 = arith.constant 0 : index
      %c0_132 = arith.constant 0 : index
      %174 = vector.load %arg12[%c0_131, %c0_132] : memref<8x128xf32, #tpu.memory_space<vmem>>, vector<8x128xf32>
      tpu.vector_store %arg12[%c0_131, %c0_132], %173 {strides = array<i32>} : memref<8x128xf32, #tpu.memory_space<vmem>>, vector<8x128xf32>,
    } else {
    }
    %c0 = arith.constant 0 : index
    %c0_1 = arith.constant 0 : index
    %c0_2 = arith.constant 0 : index
    %3 = vector.load %arg2[%c0, %c0_1, %c0_2] : memref<8x16x128xbf16, #tpu.memory_space<vmem>>, vector<8x16x128xbf16>
    %4 = vector.shape_cast %3 : vector<8x16x128xbf16> to vector<128x128xbf16>
    %c0_3 = arith.constant 0 : index
    %c0_4 = arith.constant 0 : index
    %5 = vector.load %arg5[%c0_3, %c0_4] : memref<128x128xbf16, #tpu.memory_space<vmem>>, vector<128x128xbf16>
    %cst = arith.constant dense<0.000000e+00> : vector<128x128xf32>
    %6 = tpu.matmul %4, %5, %cst {dimension_numbers = #tpu.dot_dimension_numbers<[1], [0], [0], [1], [0, 0, 1, 1], [], []>} : vector<128x128xbf16>, vector<128x128xbf16>, vector<128x128xf32> -> vector<128x128xf32>
    %c0_5 = arith.constant 0 : index
    %c0_6 = arith.constant 0 : index
    %7 = vector.load %arg7[%c0_5, %c0_6] : memref<1x128xf32, #tpu.memory_space<vmem>>, vector<1x128xf32>
    %8 = vector.broadcast %7 : vector<1x128xf32> to vector<128x128xf32>
    %9 = arith.addf %6, %8 : vector<128x128xf32>
    %10 = vector.shape_cast %9 : vector<128x128xf32> to vector<8x16x128xf32>
    %c0_7 = arith.constant 0 : index
    %c0_8 = arith.constant 0 : index
    %c0_9 = arith.constant 0 : index
    %11 = vector.load %arg13[%c0_7, %c0_8, %c0_9] : memref<8x16x128xf32, #tpu.memory_space<vmem>>, vector<8x16x128xf32>
    tpu.vector_store %arg13[%c0_7, %c0_8, %c0_9], %10 {strides = array<i32>} : memref<8x16x128xf32, #tpu.memory_space<vmem>>, vector<8x16x128xf32>,
    %c0_10 = arith.constant 0 : index
    %c0_11 = arith.constant 0 : index
    %12 = vector.load %arg6[%c0_10, %c0_11] : memref<128x128xbf16, #tpu.memory_space<vmem>>, vector<128x128xbf16>
    %c0_12 = arith.constant 0 : index
    %c0_13 = arith.constant 0 : index
    %13 = vector.load %arg12[%c0_12, %c0_13] : memref<8x128xf32, #tpu.memory_space<vmem>>, vector<8x128xf32>
    %c0_14 = arith.constant 0 : index
    %c0_15 = arith.constant 0 : index
    %c0_16 = arith.constant 0 : index
    %14 = vector.load %arg13[%c0_14, %c0_15, %c0_16] : memref<8x16x128xf32, #tpu.memory_space<vmem>>, vector<8x1x128xf32>
    %15 = vector.shape_cast %14 : vector<8x1x128xf32> to vector<8x128xf32>
    %16 = arith.truncf %13 : vector<8x128xf32> to vector<8x128xbf16>
    %cst_17 = arith.constant dense<0.000000e+00> : vector<8x128xf32>
    %17 = tpu.matmul %16, %12, %cst_17 {dimension_numbers = #tpu.dot_dimension_numbers<[1], [0], [0], [1], [0, 0, 1, 1], [], []>} : vector<8x128xbf16>, vector<128x128xbf16>, vector<8x128xf32> -> vector<8x128xf32>
    %18 = arith.addf %15, %17 : vector<8x128xf32>
    %19 = math.tanh %18 : vector<8x128xf32>
    %c0_18 = arith.constant 0 : index
    %c0_19 = arith.constant 0 : index
    %c0_20 = arith.constant 0 : index
    %20 = vector.load %arg13[%c0_18, %c0_19, %c0_20] : memref<8x16x128xf32, #tpu.memory_space<vmem>>, vector<8x1x128xf32>
    %21 = vector.shape_cast %20 : vector<8x1x128xf32> to vector<8x128xf32>
    %22 = vector.shape_cast %19 : vector<8x128xf32> to vector<8x1x128xf32>
    tpu.vector_store %arg13[%c0_18, %c0_19, %c0_20], %22 {strides = array<i32>} : memref<8x16x128xf32, #tpu.memory_space<vmem>>, vector<8x1x128xf32>,
    %c0_21 = arith.constant 0 : index
    %c1 = arith.constant 1 : index
    %c0_22 = arith.constant 0 : index
    %23 = vector.load %arg13[%c0_21, %c1, %c0_22] : memref<8x16x128xf32, #tpu.memory_space<vmem>>, vector<8x1x128xf32>
    %24 = vector.shape_cast %23 : vector<8x1x128xf32> to vector<8x128xf32>
    %25 = arith.truncf %19 : vector<8x128xf32> to vector<8x128xbf16>
    %cst_23 = arith.constant dense<0.000000e+00> : vector<8x128xf32>
    %26 = tpu.matmul %25, %12, %cst_23 {dimension_numbers = #tpu.dot_dimension_numbers<[1], [0], [0], [1], [0, 0, 1, 1], [], []>} : vector<8x128xbf16>, vector<128x128xbf16>, vector<8x128xf32> -> vector<8x128xf32>
    %27 = arith.addf %24, %26 : vector<8x128xf32>
    %28 = math.tanh %27 : vector<8x128xf32>
    %c0_24 = arith.constant 0 : index
    %c1_25 = arith.constant 1 : index
    %c0_26 = arith.constant 0 : index
    %29 = vector.load %arg13[%c0_24, %c1_25, %c0_26] : memref<8x16x128xf32, #tpu.memory_space<vmem>>, vector<8x1x128xf32>
    %30 = vector.shape_cast %29 : vector<8x1x128xf32> to vector<8x128xf32>
    %31 = vector.shape_cast %28 : vector<8x128xf32> to vector<8x1x128xf32>
    tpu.vector_store %arg13[%c0_24, %c1_25, %c0_26], %31 {strides = array<i32>} : memref<8x16x128xf32, #tpu.memory_space<vmem>>, vector<8x1x128xf32>,
    %c0_27 = arith.constant 0 : index
    %c2 = arith.constant 2 : index
    %c0_28 = arith.constant 0 : index
    %32 = vector.load %arg13[%c0_27, %c2, %c0_28] : memref<8x16x128xf32, #tpu.memory_space<vmem>>, vector<8x1x128xf32>
    %33 = vector.shape_cast %32 : vector<8x1x128xf32> to vector<8x128xf32>
    %34 = arith.truncf %28 : vector<8x128xf32> to vector<8x128xbf16>
    %cst_29 = arith.constant dense<0.000000e+00> : vector<8x128xf32>
    %35 = tpu.matmul %34, %12, %cst_29 {dimension_numbers = #tpu.dot_dimension_numbers<[1], [0], [0], [1], [0, 0, 1, 1], [], []>} : vector<8x128xbf16>, vector<128x128xbf16>, vector<8x128xf32> -> vector<8x128xf32>
    %36 = arith.addf %33, %35 : vector<8x128xf32>
    %37 = math.tanh %36 : vector<8x128xf32>
    %c0_30 = arith.constant 0 : index
    %c2_31 = arith.constant 2 : index
    %c0_32 = arith.constant 0 : index
    %38 = vector.load %arg13[%c0_30, %c2_31, %c0_32] : memref<8x16x128xf32, #tpu.memory_space<vmem>>, vector<8x1x128xf32>
    %39 = vector.shape_cast %38 : vector<8x1x128xf32> to vector<8x128xf32>
    %40 = vector.shape_cast %37 : vector<8x128xf32> to vector<8x1x128xf32>
    tpu.vector_store %arg13[%c0_30, %c2_31, %c0_32], %40 {strides = array<i32>} : memref<8x16x128xf32, #tpu.memory_space<vmem>>, vector<8x1x128xf32>,
    %c0_33 = arith.constant 0 : index
    %c3 = arith.constant 3 : index
    %c0_34 = arith.constant 0 : index
    %41 = vector.load %arg13[%c0_33, %c3, %c0_34] : memref<8x16x128xf32, #tpu.memory_space<vmem>>, vector<8x1x128xf32>
    %42 = vector.shape_cast %41 : vector<8x1x128xf32> to vector<8x128xf32>
    %43 = arith.truncf %37 : vector<8x128xf32> to vector<8x128xbf16>
    %cst_35 = arith.constant dense<0.000000e+00> : vector<8x128xf32>
    %44 = tpu.matmul %43, %12, %cst_35 {dimension_numbers = #tpu.dot_dimension_numbers<[1], [0], [0], [1], [0, 0, 1, 1], [], []>} : vector<8x128xbf16>, vector<128x128xbf16>, vector<8x128xf32> -> vector<8x128xf32>
    %45 = arith.addf %42, %44 : vector<8x128xf32>
    %46 = math.tanh %45 : vector<8x128xf32>
    %c0_36 = arith.constant 0 : index
    %c3_37 = arith.constant 3 : index
    %c0_38 = arith.constant 0 : index
    %47 = vector.load %arg13[%c0_36, %c3_37, %c0_38] : memref<8x16x128xf32, #tpu.memory_space<vmem>>, vector<8x1x128xf32>
    %48 = vector.shape_cast %47 : vector<8x1x128xf32> to vector<8x128xf32>
    %49 = vector.shape_cast %46 : vector<8x128xf32> to vector<8x1x128xf32>
    tpu.vector_store %arg13[%c0_36, %c3_37, %c0_38], %49 {strides = array<i32>} : memref<8x16x128xf32, #tpu.memory_space<vmem>>, vector<8x1x128xf32>,
    %c0_39 = arith.constant 0 : index
    %c4 = arith.constant 4 : index
    %c0_40 = arith.constant 0 : index
    %50 = vector.load %arg13[%c0_39, %c4, %c0_40] : memref<8x16x128xf32, #tpu.memory_space<vmem>>, vector<8x1x128xf32>
    %51 = vector.shape_cast %50 : vector<8x1x128xf32> to vector<8x128xf32>
    %52 = arith.truncf %46 : vector<8x128xf32> to vector<8x128xbf16>
    %cst_41 = arith.constant dense<0.000000e+00> : vector<8x128xf32>
    %53 = tpu.matmul %52, %12, %cst_41 {dimension_numbers = #tpu.dot_dimension_numbers<[1], [0], [0], [1], [0, 0, 1, 1], [], []>} : vector<8x128xbf16>, vector<128x128xbf16>, vector<8x128xf32> -> vector<8x128xf32>
    %54 = arith.addf %51, %53 : vector<8x128xf32>
    %55 = math.tanh %54 : vector<8x128xf32>
    %c0_42 = arith.constant 0 : index
    %c4_43 = arith.constant 4 : index
    %c0_44 = arith.constant 0 : index
    %56 = vector.load %arg13[%c0_42, %c4_43, %c0_44] : memref<8x16x128xf32, #tpu.memory_space<vmem>>, vector<8x1x128xf32>
    %57 = vector.shape_cast %56 : vector<8x1x128xf32> to vector<8x128xf32>
    %58 = vector.shape_cast %55 : vector<8x128xf32> to vector<8x1x128xf32>
    tpu.vector_store %arg13[%c0_42, %c4_43, %c0_44], %58 {strides = array<i32>} : memref<8x16x128xf32, #tpu.memory_space<vmem>>, vector<8x1x128xf32>,
    %c0_45 = arith.constant 0 : index
    %c5 = arith.constant 5 : index
    %c0_46 = arith.constant 0 : index
    %59 = vector.load %arg13[%c0_45, %c5, %c0_46] : memref<8x16x128xf32, #tpu.memory_space<vmem>>, vector<8x1x128xf32>
    %60 = vector.shape_cast %59 : vector<8x1x128xf32> to vector<8x128xf32>
    %61 = arith.truncf %55 : vector<8x128xf32> to vector<8x128xbf16>
    %cst_47 = arith.constant dense<0.000000e+00> : vector<8x128xf32>
    %62 = tpu.matmul %61, %12, %cst_47 {dimension_numbers = #tpu.dot_dimension_numbers<[1], [0], [0], [1], [0, 0, 1, 1], [], []>} : vector<8x128xbf16>, vector<128x128xbf16>, vector<8x128xf32> -> vector<8x128xf32>
    %63 = arith.addf %60, %62 : vector<8x128xf32>
    %64 = math.tanh %63 : vector<8x128xf32>
    %c0_48 = arith.constant 0 : index
    %c5_49 = arith.constant 5 : index
    %c0_50 = arith.constant 0 : index
    %65 = vector.load %arg13[%c0_48, %c5_49, %c0_50] : memref<8x16x128xf32, #tpu.memory_space<vmem>>, vector<8x1x128xf32>
    %66 = vector.shape_cast %65 : vector<8x1x128xf32> to vector<8x128xf32>
    %67 = vector.shape_cast %64 : vector<8x128xf32> to vector<8x1x128xf32>
    tpu.vector_store %arg13[%c0_48, %c5_49, %c0_50], %67 {strides = array<i32>} : memref<8x16x128xf32, #tpu.memory_space<vmem>>, vector<8x1x128xf32>,
    %c0_51 = arith.constant 0 : index
    %c6 = arith.constant 6 : index
    %c0_52 = arith.constant 0 : index
    %68 = vector.load %arg13[%c0_51, %c6, %c0_52] : memref<8x16x128xf32, #tpu.memory_space<vmem>>, vector<8x1x128xf32>
    %69 = vector.shape_cast %68 : vector<8x1x128xf32> to vector<8x128xf32>
    %70 = arith.truncf %64 : vector<8x128xf32> to vector<8x128xbf16>
    %cst_53 = arith.constant dense<0.000000e+00> : vector<8x128xf32>
    %71 = tpu.matmul %70, %12, %cst_53 {dimension_numbers = #tpu.dot_dimension_numbers<[1], [0], [0], [1], [0, 0, 1, 1], [], []>} : vector<8x128xbf16>, vector<128x128xbf16>, vector<8x128xf32> -> vector<8x128xf32>
    %72 = arith.addf %69, %71 : vector<8x128xf32>
    %73 = math.tanh %72 : vector<8x128xf32>
    %c0_54 = arith.constant 0 : index
    %c6_55 = arith.constant 6 : index
    %c0_56 = arith.constant 0 : index
    %74 = vector.load %arg13[%c0_54, %c6_55, %c0_56] : memref<8x16x128xf32, #tpu.memory_space<vmem>>, vector<8x1x128xf32>
    %75 = vector.shape_cast %74 : vector<8x1x128xf32> to vector<8x128xf32>
    %76 = vector.shape_cast %73 : vector<8x128xf32> to vector<8x1x128xf32>
    tpu.vector_store %arg13[%c0_54, %c6_55, %c0_56], %76 {strides = array<i32>} : memref<8x16x128xf32, #tpu.memory_space<vmem>>, vector<8x1x128xf32>,
    %c0_57 = arith.constant 0 : index
    %c7 = arith.constant 7 : index
    %c0_58 = arith.constant 0 : index
    %77 = vector.load %arg13[%c0_57, %c7, %c0_58] : memref<8x16x128xf32, #tpu.memory_space<vmem>>, vector<8x1x128xf32>
    %78 = vector.shape_cast %77 : vector<8x1x128xf32> to vector<8x128xf32>
    %79 = arith.truncf %73 : vector<8x128xf32> to vector<8x128xbf16>
    %cst_59 = arith.constant dense<0.000000e+00> : vector<8x128xf32>
    %80 = tpu.matmul %79, %12, %cst_59 {dimension_numbers = #tpu.dot_dimension_numbers<[1], [0], [0], [1], [0, 0, 1, 1], [], []>} : vector<8x128xbf16>, vector<128x128xbf16>, vector<8x128xf32> -> vector<8x128xf32>
    %81 = arith.addf %78, %80 : vector<8x128xf32>
    %82 = math.tanh %81 : vector<8x128xf32>
    %c0_60 = arith.constant 0 : index
    %c7_61 = arith.constant 7 : index
    %c0_62 = arith.constant 0 : index
    %83 = vector.load %arg13[%c0_60, %c7_61, %c0_62] : memref<8x16x128xf32, #tpu.memory_space<vmem>>, vector<8x1x128xf32>
    %84 = vector.shape_cast %83 : vector<8x1x128xf32> to vector<8x128xf32>
    %85 = vector.shape_cast %82 : vector<8x128xf32> to vector<8x1x128xf32>
    tpu.vector_store %arg13[%c0_60, %c7_61, %c0_62], %85 {strides = array<i32>} : memref<8x16x128xf32, #tpu.memory_space<vmem>>, vector<8x1x128xf32>,
    %c0_63 = arith.constant 0 : index
    %c8 = arith.constant 8 : index
    %c0_64 = arith.constant 0 : index
    %86 = vector.load %arg13[%c0_63, %c8, %c0_64] : memref<8x16x128xf32, #tpu.memory_space<vmem>>, vector<8x1x128xf32>
    %87 = vector.shape_cast %86 : vector<8x1x128xf32> to vector<8x128xf32>
    %88 = arith.truncf %82 : vector<8x128xf32> to vector<8x128xbf16>
    %cst_65 = arith.constant dense<0.000000e+00> : vector<8x128xf32>
    %89 = tpu.matmul %88, %12, %cst_65 {dimension_numbers = #tpu.dot_dimension_numbers<[1], [0], [0], [1], [0, 0, 1, 1], [], []>} : vector<8x128xbf16>, vector<128x128xbf16>, vector<8x128xf32> -> vector<8x128xf32>
    %90 = arith.addf %87, %89 : vector<8x128xf32>
    %91 = math.tanh %90 : vector<8x128xf32>
    %c0_66 = arith.constant 0 : index
    %c8_67 = arith.constant 8 : index
    %c0_68 = arith.constant 0 : index
    %92 = vector.load %arg13[%c0_66, %c8_67, %c0_68] : memref<8x16x128xf32, #tpu.memory_space<vmem>>, vector<8x1x128xf32>
    %93 = vector.shape_cast %92 : vector<8x1x128xf32> to vector<8x128xf32>
    %94 = vector.shape_cast %91 : vector<8x128xf32> to vector<8x1x128xf32>
    tpu.vector_store %arg13[%c0_66, %c8_67, %c0_68], %94 {strides = array<i32>} : memref<8x16x128xf32, #tpu.memory_space<vmem>>, vector<8x1x128xf32>,
    %c0_69 = arith.constant 0 : index
    %c9 = arith.constant 9 : index
    %c0_70 = arith.constant 0 : index
    %95 = vector.load %arg13[%c0_69, %c9, %c0_70] : memref<8x16x128xf32, #tpu.memory_space<vmem>>, vector<8x1x128xf32>
    %96 = vector.shape_cast %95 : vector<8x1x128xf32> to vector<8x128xf32>
    %97 = arith.truncf %91 : vector<8x128xf32> to vector<8x128xbf16>
    %cst_71 = arith.constant dense<0.000000e+00> : vector<8x128xf32>
    %98 = tpu.matmul %97, %12, %cst_71 {dimension_numbers = #tpu.dot_dimension_numbers<[1], [0], [0], [1], [0, 0, 1, 1], [], []>} : vector<8x128xbf16>, vector<128x128xbf16>, vector<8x128xf32> -> vector<8x128xf32>
    %99 = arith.addf %96, %98 : vector<8x128xf32>
    %100 = math.tanh %99 : vector<8x128xf32>
    %c0_72 = arith.constant 0 : index
    %c9_73 = arith.constant 9 : index
    %c0_74 = arith.constant 0 : index
    %101 = vector.load %arg13[%c0_72, %c9_73, %c0_74] : memref<8x16x128xf32, #tpu.memory_space<vmem>>, vector<8x1x128xf32>
    %102 = vector.shape_cast %101 : vector<8x1x128xf32> to vector<8x128xf32>
    %103 = vector.shape_cast %100 : vector<8x128xf32> to vector<8x1x128xf32>
    tpu.vector_store %arg13[%c0_72, %c9_73, %c0_74], %103 {strides = array<i32>} : memref<8x16x128xf32, #tpu.memory_space<vmem>>, vector<8x1x128xf32>,
    %c0_75 = arith.constant 0 : index
    %c10 = arith.constant 10 : index
    %c0_76 = arith.constant 0 : index
    %104 = vector.load %arg13[%c0_75, %c10, %c0_76] : memref<8x16x128xf32, #tpu.memory_space<vmem>>, vector<8x1x128xf32>
    %105 = vector.shape_cast %104 : vector<8x1x128xf32> to vector<8x128xf32>
    %106 = arith.truncf %100 : vector<8x128xf32> to vector<8x128xbf16>
    %cst_77 = arith.constant dense<0.000000e+00> : vector<8x128xf32>
    %107 = tpu.matmul %106, %12, %cst_77 {dimension_numbers = #tpu.dot_dimension_numbers<[1], [0], [0], [1], [0, 0, 1, 1], [], []>} : vector<8x128xbf16>, vector<128x128xbf16>, vector<8x128xf32> -> vector<8x128xf32>
    %108 = arith.addf %105, %107 : vector<8x128xf32>
    %109 = math.tanh %108 : vector<8x128xf32>
    %c0_78 = arith.constant 0 : index
    %c10_79 = arith.constant 10 : index
    %c0_80 = arith.constant 0 : index
    %110 = vector.load %arg13[%c0_78, %c10_79, %c0_80] : memref<8x16x128xf32, #tpu.memory_space<vmem>>, vector<8x1x128xf32>
    %111 = vector.shape_cast %110 : vector<8x1x128xf32> to vector<8x128xf32>
    %112 = vector.shape_cast %109 : vector<8x128xf32> to vector<8x1x128xf32>
    tpu.vector_store %arg13[%c0_78, %c10_79, %c0_80], %112 {strides = array<i32>} : memref<8x16x128xf32, #tpu.memory_space<vmem>>, vector<8x1x128xf32>,
    %c0_81 = arith.constant 0 : index
    %c11 = arith.constant 11 : index
    %c0_82 = arith.constant 0 : index
    %113 = vector.load %arg13[%c0_81, %c11, %c0_82] : memref<8x16x128xf32, #tpu.memory_space<vmem>>, vector<8x1x128xf32>
    %114 = vector.shape_cast %113 : vector<8x1x128xf32> to vector<8x128xf32>
    %115 = arith.truncf %109 : vector<8x128xf32> to vector<8x128xbf16>
    %cst_83 = arith.constant dense<0.000000e+00> : vector<8x128xf32>
    %116 = tpu.matmul %115, %12, %cst_83 {dimension_numbers = #tpu.dot_dimension_numbers<[1], [0], [0], [1], [0, 0, 1, 1], [], []>} : vector<8x128xbf16>, vector<128x128xbf16>, vector<8x128xf32> -> vector<8x128xf32>
    %117 = arith.addf %114, %116 : vector<8x128xf32>
    %118 = math.tanh %117 : vector<8x128xf32>
    %c0_84 = arith.constant 0 : index
    %c11_85 = arith.constant 11 : index
    %c0_86 = arith.constant 0 : index
    %119 = vector.load %arg13[%c0_84, %c11_85, %c0_86] : memref<8x16x128xf32, #tpu.memory_space<vmem>>, vector<8x1x128xf32>
    %120 = vector.shape_cast %119 : vector<8x1x128xf32> to vector<8x128xf32>
    %121 = vector.shape_cast %118 : vector<8x128xf32> to vector<8x1x128xf32>
    tpu.vector_store %arg13[%c0_84, %c11_85, %c0_86], %121 {strides = array<i32>} : memref<8x16x128xf32, #tpu.memory_space<vmem>>, vector<8x1x128xf32>,
    %c0_87 = arith.constant 0 : index
    %c12 = arith.constant 12 : index
    %c0_88 = arith.constant 0 : index
    %122 = vector.load %arg13[%c0_87, %c12, %c0_88] : memref<8x16x128xf32, #tpu.memory_space<vmem>>, vector<8x1x128xf32>
    %123 = vector.shape_cast %122 : vector<8x1x128xf32> to vector<8x128xf32>
    %124 = arith.truncf %118 : vector<8x128xf32> to vector<8x128xbf16>
    %cst_89 = arith.constant dense<0.000000e+00> : vector<8x128xf32>
    %125 = tpu.matmul %124, %12, %cst_89 {dimension_numbers = #tpu.dot_dimension_numbers<[1], [0], [0], [1], [0, 0, 1, 1], [], []>} : vector<8x128xbf16>, vector<128x128xbf16>, vector<8x128xf32> -> vector<8x128xf32>
    %126 = arith.addf %123, %125 : vector<8x128xf32>
    %127 = math.tanh %126 : vector<8x128xf32>
    %c0_90 = arith.constant 0 : index
    %c12_91 = arith.constant 12 : index
    %c0_92 = arith.constant 0 : index
    %128 = vector.load %arg13[%c0_90, %c12_91, %c0_92] : memref<8x16x128xf32, #tpu.memory_space<vmem>>, vector<8x1x128xf32>
    %129 = vector.shape_cast %128 : vector<8x1x128xf32> to vector<8x128xf32>
    %130 = vector.shape_cast %127 : vector<8x128xf32> to vector<8x1x128xf32>
    tpu.vector_store %arg13[%c0_90, %c12_91, %c0_92], %130 {strides = array<i32>} : memref<8x16x128xf32, #tpu.memory_space<vmem>>, vector<8x1x128xf32>,
    %c0_93 = arith.constant 0 : index
    %c13 = arith.constant 13 : index
    %c0_94 = arith.constant 0 : index
    %131 = vector.load %arg13[%c0_93, %c13, %c0_94] : memref<8x16x128xf32, #tpu.memory_space<vmem>>, vector<8x1x128xf32>
    %132 = vector.shape_cast %131 : vector<8x1x128xf32> to vector<8x128xf32>
    %133 = arith.truncf %127 : vector<8x128xf32> to vector<8x128xbf16>
    %cst_95 = arith.constant dense<0.000000e+00> : vector<8x128xf32>
    %134 = tpu.matmul %133, %12, %cst_95 {dimension_numbers = #tpu.dot_dimension_numbers<[1], [0], [0], [1], [0, 0, 1, 1], [], []>} : vector<8x128xbf16>, vector<128x128xbf16>, vector<8x128xf32> -> vector<8x128xf32>
    %135 = arith.addf %132, %134 : vector<8x128xf32>
    %136 = math.tanh %135 : vector<8x128xf32>
    %c0_96 = arith.constant 0 : index
    %c13_97 = arith.constant 13 : index
    %c0_98 = arith.constant 0 : index
    %137 = vector.load %arg13[%c0_96, %c13_97, %c0_98] : memref<8x16x128xf32, #tpu.memory_space<vmem>>, vector<8x1x128xf32>
    %138 = vector.shape_cast %137 : vector<8x1x128xf32> to vector<8x128xf32>
    %139 = vector.shape_cast %136 : vector<8x128xf32> to vector<8x1x128xf32>
    tpu.vector_store %arg13[%c0_96, %c13_97, %c0_98], %139 {strides = array<i32>} : memref<8x16x128xf32, #tpu.memory_space<vmem>>, vector<8x1x128xf32>,
    %c0_99 = arith.constant 0 : index
    %c14 = arith.constant 14 : index
    %c0_100 = arith.constant 0 : index
    %140 = vector.load %arg13[%c0_99, %c14, %c0_100] : memref<8x16x128xf32, #tpu.memory_space<vmem>>, vector<8x1x128xf32>
    %141 = vector.shape_cast %140 : vector<8x1x128xf32> to vector<8x128xf32>
    %142 = arith.truncf %136 : vector<8x128xf32> to vector<8x128xbf16>
    %cst_101 = arith.constant dense<0.000000e+00> : vector<8x128xf32>
    %143 = tpu.matmul %142, %12, %cst_101 {dimension_numbers = #tpu.dot_dimension_numbers<[1], [0], [0], [1], [0, 0, 1, 1], [], []>} : vector<8x128xbf16>, vector<128x128xbf16>, vector<8x128xf32> -> vector<8x128xf32>
    %144 = arith.addf %141, %143 : vector<8x128xf32>
    %145 = math.tanh %144 : vector<8x128xf32>
    %c0_102 = arith.constant 0 : index
    %c14_103 = arith.constant 14 : index
    %c0_104 = arith.constant 0 : index
    %146 = vector.load %arg13[%c0_102, %c14_103, %c0_104] : memref<8x16x128xf32, #tpu.memory_space<vmem>>, vector<8x1x128xf32>
    %147 = vector.shape_cast %146 : vector<8x1x128xf32> to vector<8x128xf32>
    %148 = vector.shape_cast %145 : vector<8x128xf32> to vector<8x1x128xf32>
    tpu.vector_store %arg13[%c0_102, %c14_103, %c0_104], %148 {strides = array<i32>} : memref<8x16x128xf32, #tpu.memory_space<vmem>>, vector<8x1x128xf32>,
    %c0_105 = arith.constant 0 : index
    %c15 = arith.constant 15 : index
    %c0_106 = arith.constant 0 : index
    %149 = vector.load %arg13[%c0_105, %c15, %c0_106] : memref<8x16x128xf32, #tpu.memory_space<vmem>>, vector<8x1x128xf32>
    %150 = vector.shape_cast %149 : vector<8x1x128xf32> to vector<8x128xf32>
    %151 = arith.truncf %145 : vector<8x128xf32> to vector<8x128xbf16>
    %cst_107 = arith.constant dense<0.000000e+00> : vector<8x128xf32>
    %152 = tpu.matmul %151, %12, %cst_107 {dimension_numbers = #tpu.dot_dimension_numbers<[1], [0], [0], [1], [0, 0, 1, 1], [], []>} : vector<8x128xbf16>, vector<128x128xbf16>, vector<8x128xf32> -> vector<8x128xf32>
    %153 = arith.addf %150, %152 : vector<8x128xf32>
    %154 = math.tanh %153 : vector<8x128xf32>
    %c0_108 = arith.constant 0 : index
    %c15_109 = arith.constant 15 : index
    %c0_110 = arith.constant 0 : index
    %155 = vector.load %arg13[%c0_108, %c15_109, %c0_110] : memref<8x16x128xf32, #tpu.memory_space<vmem>>, vector<8x1x128xf32>
    %156 = vector.shape_cast %155 : vector<8x1x128xf32> to vector<8x128xf32>
    %157 = vector.shape_cast %154 : vector<8x128xf32> to vector<8x1x128xf32>
    tpu.vector_store %arg13[%c0_108, %c15_109, %c0_110], %157 {strides = array<i32>} : memref<8x16x128xf32, #tpu.memory_space<vmem>>, vector<8x1x128xf32>,
    %c0_111 = arith.constant 0 : index
    %c0_112 = arith.constant 0 : index
    %158 = vector.load %arg12[%c0_111, %c0_112] : memref<8x128xf32, #tpu.memory_space<vmem>>, vector<8x128xf32>
    tpu.vector_store %arg12[%c0_111, %c0_112], %154 {strides = array<i32>} : memref<8x128xf32, #tpu.memory_space<vmem>>, vector<8x128xf32>,
    %c0_113 = arith.constant 0 : index
    %c0_114 = arith.constant 0 : index
    %159 = vector.load %arg11[%c0_113, %c0_114] : memref<8x128xf32, #tpu.memory_space<vmem>>, vector<8x128xf32>
    tpu.vector_store %arg11[%c0_113, %c0_114], %154 {strides = array<i32>} : memref<8x128xf32, #tpu.memory_space<vmem>>, vector<8x128xf32>,
    %c0_115 = arith.constant 0 : index
    %c0_116 = arith.constant 0 : index
    %c0_117 = arith.constant 0 : index
    %160 = vector.load %arg13[%c0_115, %c0_116, %c0_117] : memref<8x16x128xf32, #tpu.memory_space<vmem>>, vector<8x16x128xf32>
    %c0_118 = arith.constant 0 : index
    %c0_119 = arith.constant 0 : index
    %c0_120 = arith.constant 0 : index
    %161 = vector.load %arg3[%c0_118, %c0_119, %c0_120] : memref<8x16x128xbf16, #tpu.memory_space<vmem>>, vector<8x16x128xbf16>
    %162 = arith.extf %161 : vector<8x16x128xbf16> to vector<8x16x128xf32>
    %163 = arith.mulf %160, %162 : vector<8x16x128xf32>
    %164 = vector.shape_cast %163 : vector<8x16x128xf32> to vector<128x128xf32>
    %165 = arith.truncf %164 : vector<128x128xf32> to vector<128x128xbf16>
    %c0_121 = arith.constant 0 : index
    %c0_122 = arith.constant 0 : index
    %166 = vector.load %arg8[%c0_121, %c0_122] : memref<128x128xbf16, #tpu.memory_space<vmem>>, vector<128x128xbf16>
    %cst_123 = arith.constant dense<0.000000e+00> : vector<128x128xf32>
    %167 = tpu.matmul %165, %166, %cst_123 {dimension_numbers = #tpu.dot_dimension_numbers<[1], [0], [0], [1], [0, 0, 1, 1], [], []>} : vector<128x128xbf16>, vector<128x128xbf16>, vector<128x128xf32> -> vector<128x128xf32>
    %c0_124 = arith.constant 0 : index
    %c0_125 = arith.constant 0 : index
    %168 = vector.load %arg9[%c0_124, %c0_125] : memref<1x128xf32, #tpu.memory_space<vmem>>, vector<1x128xf32>
    %169 = vector.broadcast %168 : vector<1x128xf32> to vector<128x128xf32>
    %170 = arith.addf %167, %169 : vector<128x128xf32>
    %171 = vector.shape_cast %170 : vector<128x128xf32> to vector<8x16x128xf32>
    %c0_126 = arith.constant 0 : index
    %c0_127 = arith.constant 0 : index
    %c0_128 = arith.constant 0 : index
    %172 = vector.load %arg10[%c0_126, %c0_127, %c0_128] : memref<8x16x128xf32, #tpu.memory_space<vmem>>, vector<8x16x128xf32>
    tpu.vector_store %arg10[%c0_126, %c0_127, %c0_128], %171 {strides = array<i32>} : memref<8x16x128xf32, #tpu.memory_space<vmem>>, vector<8x16x128xf32>,
    return
  }
  func.func @transform_0(%arg0: i32, %arg1: i32) -> (i32, i32, i32) {
    %c0_i32 = arith.constant 0 : i32
    %c0_i32_0 = arith.constant 0 : i32
    return %arg0, %arg1, %c0_i32 : i32, i32, i32
  }
  func.func @transform_1(%arg0: i32, %arg1: i32) -> (i32, i32, i32) {
    %c0_i32 = arith.constant 0 : i32
    %c0_i32_0 = arith.constant 0 : i32
    return %arg0, %arg1, %c0_i32 : i32, i32, i32
  }
  func.func @transform_2(%arg0: i32, %arg1: i32) -> (i32, i32) {
    %c0_i32 = arith.constant 0 : i32
    %c0_i32_0 = arith.constant 0 : i32
    return %arg0, %c0_i32 : i32, i32
  }
  func.func @transform_3(%arg0: i32, %arg1: i32) -> (i32, i32) {
    %c0_i32 = arith.constant 0 : i32
    %c0_i32_0 = arith.constant 0 : i32
    %c0_i32_1 = arith.constant 0 : i32
    return %c0_i32, %c0_i32_0 : i32, i32
  }
  func.func @transform_4(%arg0: i32, %arg1: i32) -> (i32, i32) {
    %c0_i32 = arith.constant 0 : i32
    %c0_i32_0 = arith.constant 0 : i32
    %c0_i32_1 = arith.constant 0 : i32
    return %c0_i32, %c0_i32_0 : i32, i32
  }
  func.func @transform_5(%arg0: i32, %arg1: i32) -> (i32, i32) {
    %c0_i32 = arith.constant 0 : i32
    %c0_i32_0 = arith.constant 0 : i32
    %c0_i32_1 = arith.constant 0 : i32
    return %c0_i32, %c0_i32_0 : i32, i32
  }
  func.func @transform_6(%arg0: i32, %arg1: i32) -> (i32, i32) {
    %c0_i32 = arith.constant 0 : i32
    %c0_i32_0 = arith.constant 0 : i32
    %c0_i32_1 = arith.constant 0 : i32
    return %c0_i32, %c0_i32_0 : i32, i32
  }
  func.func @transform_7(%arg0: i32, %arg1: i32) -> (i32, i32) {
    %c0_i32 = arith.constant 0 : i32
    %c0_i32_0 = arith.constant 0 : i32
    %c0_i32_1 = arith.constant 0 : i32
    return %c0_i32, %c0_i32_0 : i32, i32
  }
  func.func @transform_8(%arg0: i32, %arg1: i32) -> (i32, i32, i32) {
    %c0_i32 = arith.constant 0 : i32
    %c0_i32_0 = arith.constant 0 : i32
    return %arg0, %arg1, %c0_i32 : i32, i32, i32
  }
  func.func @transform_9(%arg0: i32, %arg1: i32) -> (i32, i32) {
    %c0_i32 = arith.constant 0 : i32
    %c0_i32_0 = arith.constant 0 : i32
    return %arg0, %c0_i32 : i32, i32
  }
}

</mosaic_0001>

<llo_original>
// kernel: tpu_custom_call.1
$region0: #{tpu_custom_call.1}
  #allocation0 [shape = 'u32[]', space=smem, size = 0x4, offset = 0x4, fixed_abs, tag = 'smem constant byte address 0x4 - core index']
  #allocation1 [shape = 'u32[72,128]{1,0:T(1,128)}', space=vmem, size = 0x9000, scoped, tag = 'internal scratch']
  #allocation2 [shape = 'f32[8,128]{1,0:T(8,128)}', space=vmem, size = 0x1000, scoped, tag = 'scratch operand']
  #allocation3 [shape = 'f32[8,16,128]{2,1,0:T(8,128)}', space=vmem, size = 0x10000, scoped, tag = 'scratch operand']
  #allocation18 [shape = 's32[]', space=sflag, size = 0x4, offset = 0, fixed_abs, tag = 'sflag constant byte address 0x0 - dummy sync flag']
  #allocation20 [shape = 's32[]', space=sflag, size = 0x4, offset = 0, fixed_abs, tag = 'sflag constant byte address 0x0 - dummy sync flag']
  #allocation22 [shape = 's32[]', space=sflag, size = 0x4, offset = 0, fixed_abs, tag = 'sflag constant byte address 0x0 - dummy sync flag']
  %s0 = inlined_call_operand.hbm [shape: bf16[16,48,128], index: 0, kind: input, shape index: {}]
  %s1 = inlined_call_operand.hbm [shape: bf16[16,48,128], index: 1, kind: input, shape index: {}]
  %s2 = inlined_call_operand.hbm [shape: f32[16,128], index: 2, kind: input, shape index: {}]
  %s3 = inlined_call_operand.hbm [shape: bf16[128,128], index: 3, kind: input, shape index: {}]
  %s4 = inlined_call_operand.hbm [shape: bf16[128,128], index: 4, kind: input, shape index: {}]
  %s5 = inlined_call_operand.vmem [shape: f32[1,128], index: 5, kind: input, shape index: {}]
  %s6 = inlined_call_operand.hbm [shape: bf16[128,128], index: 6, kind: input, shape index: {}]
  %s7 = inlined_call_operand.vmem [shape: f32[1,128], index: 7, kind: input, shape index: {}]
  %s8 = inlined_call_operand.hbm [shape: f32[16,48,128], index: 8, kind: output, shape index: {0}]
  %s9 = inlined_call_operand.hbm [shape: f32[16,128], index: 9, kind: output, shape index: {1}]
  %10 = xla_tuple %s8, %s9
  %s11 = sld [smem:[#allocation0]]
  $region101: #{tpu_custom_call.1} parent=0
    _
  %s13 = ssub.s32 1, %s11
  %s14 = scalar_select 0, %s13, %s11
  $region1: #{tpu_custom_call.1} parent=0
    #allocation4 [shape = 'u8[65536]{0}', space=vmem, size = 0x10000, scoped, tag = 'input window, operand 0']
    #allocation5 [shape = 's32[2]{0}', space=sflag, size = 0x8, scoped, tag = 'scoped memory for tpu_custom_call.1']
    #allocation6 [shape = 's32[2]{0}', space=sflag, size = 0x8, scoped, tag = 'scoped memory for tpu_custom_call.1']
    #allocation7 [shape = 'u8[65536]{0}', space=vmem, size = 0x10000, scoped, tag = 'input window, operand 1']
    #allocation8 [shape = 's32[2]{0}', space=sflag, size = 0x8, scoped, tag = 'scoped memory for tpu_custom_call.1']
    #allocation9 [shape = 'u8[8192]{0}', space=vmem, size = 0x2000, scoped, tag = 'input window, operand 2']
    #allocation10 [shape = 'u8[32768]{0}', space=vmem, size = 0x8000, scoped, tag = 'input window, operand 3, single buffered']
    #allocation11 [shape = 's32[1]{0}', space=sflag, size = 0x4, scoped, tag = 'scoped memory for tpu_custom_call.1']
    #allocation12 [shape = 'u8[32768]{0}', space=vmem, size = 0x8000, scoped, tag = 'input window, operand 4, single buffered']
    #allocation13 [shape = 'u8[32768]{0}', space=vmem, size = 0x8000, scoped, tag = 'input window, operand 6, single buffered']
    #allocation14 [shape = 's32[1]{0}', space=sflag, size = 0x4, scoped, tag = 'scoped memory for tpu_custom_call.1']
    #allocation15 [shape = 'u8[131072]{0}', space=vmem, size = 0x20000, scoped, tag = 'output window, operand 0']
    #allocation16 [shape = 'u8[8192]{0}', space=vmem, size = 0x2000, scoped, tag = 'output window, operand 1']
    #allocation17 [shape = 's32[2]{0}', space=sflag, size = 0x8, scoped, tag = 'scoped memory for tpu_custom_call.1']
    %15 = vsyncpa [#allocation5], 0
    %s16 = scalar_lea.sflag [#allocation5], 1
    %17 = vsyncpa %s16, 0
    %18 = vsyncpa [#allocation8], 0
    %s19 = scalar_lea.sflag [#allocation8], 1
    %20 = vsyncpa %s19, 0
    %21 = vsyncpa [#allocation11], 0
    %22 = vsyncpa [#allocation14], 0
    %23 = vsyncpa [#allocation6], 0
    %s24 = scalar_lea.sflag [#allocation6], 1
    %25 = vsyncpa %s24, 0
    %26 = vsyncpa [#allocation17], 0
    %s27 = scalar_lea.sflag [#allocation17], 1
    %28 = vsyncpa %s27, 0
    loop: start=0, step=1, limit=8
    $region2: #{tpu_custom_call.1} parent=1 // loop_pre_header
      _
    $region3: #{tpu_custom_call.1} parent=1 // loop_header
      %s30 = sphi 0, %s34
      %p31 = scmp.ge.s32.totalorder %s30, 8
      %s37 = sphi 0, %s49
      %s38 = sphi 0, %s45
      %s39 = sphi 0, %s37
      %s40 = sphi 0, %s38
      %s41 = sphi 0, %s39
      %s42 = sphi 0, %s40
      %s54 = sphi 0, %s56
      %s57 = sphi 0, %s54
      %s58 = sphi 0, %s57
      %s74 = sphi 0, %s58
      %s82 = sphi 0, %s84
      %s85 = sphi 0, %s82
      %s86 = sphi 0, %s85
      %s102 = sphi 0, %s86
      %s108 = sphi 0, %s110
      %s111 = sphi 0, %s108
      %s112 = sphi 0, %s111
      %s128 = sphi 0, %s112
      %s132 = sphi 0, %s132
      %s134 = sphi 0, %s132
      %s135 = sphi 0, %s134
      %s149 = sphi 0, %s135
      %s153 = sphi 0, %s153
      %s155 = sphi 0, %s153
      %s156 = sphi 0, %s155
      %s170 = sphi 0, %s156
      %s174 = sphi 0, %s174
      %s176 = sphi 0, %s174
      %s177 = sphi 0, %s176
      %s191 = sphi 0, %s177
      %s195 = sphi 0, %s195
      %s197 = sphi 0, %s195
      %s198 = sphi 0, %s197
      %s212 = sphi 0, %s198
      %s216 = sphi 0, %s216
      %s218 = sphi 0, %s216
      %s219 = sphi 0, %s218
      %s233 = sphi 0, %s219
      %s241 = sphi 0, %s243
      %s244 = sphi 0, %s241
      %s245 = sphi 0, %s244
      %s261 = sphi 0, %s245
      %s267 = sphi 0, %s269
      %s270 = sphi 0, %s267
      %s271 = sphi 0, %s270
      %s287 = sphi 0, %s271
    $region4: #{tpu_custom_call.1} parent=1 // loop_header_branch
      %33 = sbr.rel (%p31) target = $region8
    $region5: #{tpu_custom_call.1} parent=1 // loop_body
      %s35 = ssub.s32 %s30, 1
      %s36 = ssub.s32 %s30, 2
      %s43 = sadd.s32 1, %s38
      %p44 = scmp.ge.s32.totalorder %s43, 3
      %s45 = scalar_select %p44, 0, %s43
      %s46 = sadd.s32 1, %s37
      %s47 = scalar_select %p44, %s46, %s37
      %p48 = scmp.ge.s32.totalorder %s47, 2
      %s49 = scalar_select %p48, 0, %s47
      %s50 = ssub.s32 %s37, %s49
      %s51 = ssub.s32 %s38, %s45
      %s52 = sor.u32 %s50, %s51
      %p53 = scmp.eq.s32.totalorder %s52, 0
      %s55 = sadd.s32 %s54, 1
      %s56 = scalar_select %p53, %s54, %s55
      %p59 = pneg %p53
      %p60 = scmp.eq.s32.totalorder %s30, 5
      %p61 = por %p59, %p60
      %p62 = scmp.ne.s32.totalorder %s54, %s57
      %p63 = scmp.eq.s32.totalorder %s30, 0
      %p64 = por %p62, %p63
      %p65 = scmp.ne.s32.totalorder %s54, %s57
      %p66 = scmp.eq.s32.totalorder %s35, 5
      %p67 = por %p65, %p66
      %p68 = scmp.ne.s32.totalorder %s57, %s58
      %p69 = scmp.eq.s32.totalorder %s35, 0
      %p70 = por %p68, %p69
      %p71 = scmp.ne.s32.totalorder %s57, %s58
      %p72 = scmp.eq.s32.totalorder %s36, 5
      %p73 = por %p71, %p72
      %p75 = scmp.ne.s32.totalorder %s58, %s74
      %p76 = scmp.eq.s32.totalorder %s36, 0
      %p77 = por %p75, %p76
      %s78 = ssub.s32 %s37, %s49
      %s79 = ssub.s32 %s38, %s45
      %s80 = sor.u32 %s78, %s79
      %p81 = scmp.eq.s32.totalorder %s80, 0
      %s83 = sadd.s32 %s82, 1
      %s84 = scalar_select %p81, %s82, %s83
      %p87 = pneg %p81
      %p88 = scmp.eq.s32.totalorder %s30, 5
      %p89 = por %p87, %p88
      %p90 = scmp.ne.s32.totalorder %s82, %s85
      %p91 = scmp.eq.s32.totalorder %s30, 0
      %p92 = por %p90, %p91
      %p93 = scmp.ne.s32.totalorder %s82, %s85
      %p94 = scmp.eq.s32.totalorder %s35, 5
      %p95 = por %p93, %p94
      %p96 = scmp.ne.s32.totalorder %s85, %s86
      %p97 = scmp.eq.s32.totalorder %s35, 0
      %p98 = por %p96, %p97
      %p99 = scmp.ne.s32.totalorder %s85, %s86
      %p100 = scmp.eq.s32.totalorder %s36, 5
      %p101 = por %p99, %p100
      %p103 = scmp.ne.s32.totalorder %s86, %s102
      %p104 = scmp.eq.s32.totalorder %s36, 0
      %p105 = por %p103, %p104
      %s106 = ssub.s32 %s37, %s49
      %p107 = scmp.eq.s32.totalorder %s106, 0
      %s109 = sadd.s32 %s108, 1
      %s110 = scalar_select %p107, %s108, %s109
      %p113 = pneg %p107
      %p114 = scmp.eq.s32.totalorder %s30, 5
      %p115 = por %p113, %p114
      %p116 = scmp.ne.s32.totalorder %s108, %s111
      %p117 = scmp.eq.s32.totalorder %s30, 0
      %p118 = por %p116, %p117
      %p119 = scmp.ne.s32.totalorder %s108, %s111
      %p120 = scmp.eq.s32.totalorder %s35, 5
      %p121 = por %p119, %p120
      %p122 = scmp.ne.s32.totalorder %s111, %s112
      %p123 = scmp.eq.s32.totalorder %s35, 0
      %p124 = por %p122, %p123
      %p125 = scmp.ne.s32.totalorder %s111, %s112
      %p126 = scmp.eq.s32.totalorder %s36, 5
      %p127 = por %p125, %p126
      %p129 = scmp.ne.s32.totalorder %s112, %s128
      %p130 = scmp.eq.s32.totalorder %s36, 0
      %p131 = por %p129, %p130
      %s133 = sadd.s32 %s132, 1
      %p136 = scmp.eq.s32.totalorder %s30, 5
      %p137 = scmp.ne.s32.totalorder %s132, %s134
      %p138 = scmp.eq.s32.totalorder %s30, 0
      %p139 = por %p137, %p138
      %p140 = scmp.ne.s32.totalorder %s132, %s134
      %p141 = scmp.eq.s32.totalorder %s35, 5
      %p142 = por %p140, %p141
      %p143 = scmp.ne.s32.totalorder %s134, %s135
      %p144 = scmp.eq.s32.totalorder %s35, 0
      %p145 = por %p143, %p144
      %p146 = scmp.ne.s32.totalorder %s134, %s135
      %p147 = scmp.eq.s32.totalorder %s36, 5
      %p148 = por %p146, %p147
      %p150 = scmp.ne.s32.totalorder %s135, %s149
      %p151 = scmp.eq.s32.totalorder %s36, 0
      %p152 = por %p150, %p151
      %s154 = sadd.s32 %s153, 1
      %p157 = scmp.eq.s32.totalorder %s30, 5
      %p158 = scmp.ne.s32.totalorder %s153, %s155
      %p159 = scmp.eq.s32.totalorder %s30, 0
      %p160 = por %p158, %p159
      %p161 = scmp.ne.s32.totalorder %s153, %s155
      %p162 = scmp.eq.s32.totalorder %s35, 5
      %p163 = por %p161, %p162
      %p164 = scmp.ne.s32.totalorder %s155, %s156
      %p165 = scmp.eq.s32.totalorder %s35, 0
      %p166 = por %p164, %p165
      %p167 = scmp.ne.s32.totalorder %s155, %s156
      %p168 = scmp.eq.s32.totalorder %s36, 5
      %p169 = por %p167, %p168
      %p171 = scmp.ne.s32.totalorder %s156, %s170
      %p172 = scmp.eq.s32.totalorder %s36, 0
      %p173 = por %p171, %p172
      %s175 = sadd.s32 %s174, 1
      %p178 = scmp.eq.s32.totalorder %s30, 5
      %p179 = scmp.ne.s32.totalorder %s174, %s176
      %p180 = scmp.eq.s32.totalorder %s30, 0
      %p181 = por %p179, %p180
      %p182 = scmp.ne.s32.totalorder %s174, %s176
      %p183 = scmp.eq.s32.totalorder %s35, 5
      %p184 = por %p182, %p183
      %p185 = scmp.ne.s32.totalorder %s176, %s177
      %p186 = scmp.eq.s32.totalorder %s35, 0
      %p187 = por %p185, %p186
      %p188 = scmp.ne.s32.totalorder %s176, %s177
      %p189 = scmp.eq.s32.totalorder %s36, 5
      %p190 = por %p188, %p189
      %p192 = scmp.ne.s32.totalorder %s177, %s191
      %p193 = scmp.eq.s32.totalorder %s36, 0
      %p194 = por %p192, %p193
      %s196 = sadd.s32 %s195, 1
      %p199 = scmp.eq.s32.totalorder %s30, 5
      %p200 = scmp.ne.s32.totalorder %s195, %s197
      %p201 = scmp.eq.s32.totalorder %s30, 0
      %p202 = por %p200, %p201
      %p203 = scmp.ne.s32.totalorder %s195, %s197
      %p204 = scmp.eq.s32.totalorder %s35, 5
      %p205 = por %p203, %p204
      %p206 = scmp.ne.s32.totalorder %s197, %s198
      %p207 = scmp.eq.s32.totalorder %s35, 0
      %p208 = por %p206, %p207
      %p209 = scmp.ne.s32.totalorder %s197, %s198
      %p210 = scmp.eq.s32.totalorder %s36, 5
      %p211 = por %p209, %p210
      %p213 = scmp.ne.s32.totalorder %s198, %s212
      %p214 = scmp.eq.s32.totalorder %s36, 0
      %p215 = por %p213, %p214
      %s217 = sadd.s32 %s216, 1
      %p220 = scmp.eq.s32.totalorder %s30, 5
      %p221 = scmp.ne.s32.totalorder %s216, %s218
      %p222 = scmp.eq.s32.totalorder %s30, 0
      %p223 = por %p221, %p222
      %p224 = scmp.ne.s32.totalorder %s216, %s218
      %p225 = scmp.eq.s32.totalorder %s35, 5
      %p226 = por %p224, %p225
      %p227 = scmp.ne.s32.totalorder %s218, %s219
      %p228 = scmp.eq.s32.totalorder %s35, 0
      %p229 = por %p227, %p228
      %p230 = scmp.ne.s32.totalorder %s218, %s219
      %p231 = scmp.eq.s32.totalorder %s36, 5
      %p232 = por %p230, %p231
      %p234 = scmp.ne.s32.totalorder %s219, %s233
      %p235 = scmp.eq.s32.totalorder %s36, 0
      %p236 = por %p234, %p235
      %s237 = ssub.s32 %s37, %s49
      %s238 = ssub.s32 %s38, %s45
      %s239 = sor.u32 %s237, %s238
      %p240 = scmp.eq.s32.totalorder %s239, 0
      %s242 = sadd.s32 %s241, 1
      %s243 = scalar_select %p240, %s241, %s242
      %p246 = pneg %p240
      %p247 = scmp.eq.s32.totalorder %s30, 5
      %p248 = por %p246, %p247
      %p249 = scmp.ne.s32.totalorder %s241, %s244
      %p250 = scmp.eq.s32.totalorder %s30, 0
      %p251 = por %p249, %p250
      %p252 = scmp.ne.s32.totalorder %s241, %s244
      %p253 = scmp.eq.s32.totalorder %s35, 5
      %p254 = por %p252, %p253
      %p255 = scmp.ne.s32.totalorder %s244, %s245
      %p256 = scmp.eq.s32.totalorder %s35, 0
      %p257 = por %p255, %p256
      %p258 = scmp.ne.s32.totalorder %s244, %s245
      %p259 = scmp.eq.s32.totalorder %s36, 5
      %p260 = por %p258, %p259
      %p262 = scmp.ne.s32.totalorder %s245, %s261
      %p263 = scmp.eq.s32.totalorder %s36, 0
      %p264 = por %p262, %p263
      %s265 = ssub.s32 %s37, %s49
      %p266 = scmp.eq.s32.totalorder %s265, 0
      %s268 = sadd.s32 %s267, 1
      %s269 = scalar_select %p266, %s267, %s268
      %p272 = pneg %p266
      %p273 = scmp.eq.s32.totalorder %s30, 5
      %p274 = por %p272, %p273
      %p275 = scmp.ne.s32.totalorder %s267, %s270
      %p276 = scmp.eq.s32.totalorder %s30, 0
      %p277 = por %p275, %p276
      %p278 = scmp.ne.s32.totalorder %s267, %s270
      %p279 = scmp.eq.s32.totalorder %s35, 5
      %p280 = por %p278, %p279
      %p281 = scmp.ne.s32.totalorder %s270, %s271
      %p282 = scmp.eq.s32.totalorder %s35, 0
      %p283 = por %p281, %p282
      %p284 = scmp.ne.s32.totalorder %s270, %s271
      %p285 = scmp.eq.s32.totalorder %s36, 5
      %p286 = por %p284, %p285
      %p288 = scmp.ne.s32.totalorder %s271, %s287
      %p289 = scmp.eq.s32.totalorder %s36, 0
      %p290 = por %p288, %p289
      %p291 = scmp.le.s32.totalorder 1, %s30
      %p292 = scmp.lt.s32.totalorder %s30, 7
      %p293 = pnand %p291, %p292
      %p294 = pneg %p293
      // Predicated region
      $region9: #{tpu_custom_call.1} parent=5 // pred_check
        _
      $region10: #{tpu_custom_call.1} parent=5 // pred_check_branch
        %296 = sbr.rel (%p293) target = $region12
      $region11: #{tpu_custom_call.1} parent=5 // pred_region
        %s297 = ssub.s32 %s30, 1
        // Predicated region
        $region13: #{tpu_custom_call.1} parent=11 // pred_check
          %p298 = pneg %p145
        $region14: #{tpu_custom_call.1} parent=11 // pred_check_branch
          %300 = sbr.rel (%p298) target = $region16
        $region15: #{tpu_custom_call.1} parent=11 // pred_region
          %302 = vsyncadd [#allocation11], 0
          %s303 = sshll.u32 %s3, 4
          %s304 = int_to_ptr.hbm [resolvable:$true] %s303
          %s305 = sshll.u32 [#allocation10], 4
          %s306 = int_to_ptr.vmem [resolvable:$true] %s305
          %311 = dma.hbm_to_vmem [thread:$0]  %s304, 1024, %s306, [#allocation11], 64, 64, 4
        $region16: #{tpu_custom_call.1} parent=11 // pred_fallthru
          _
        // Predicated region
        $region17: #{tpu_custom_call.1} parent=11 // pred_check
          %p312 = pneg %p166
        $region18: #{tpu_custom_call.1} parent=11 // pred_check_branch
          %314 = sbr.rel (%p312) target = $region20
        $region19: #{tpu_custom_call.1} parent=11 // pred_region
          %316 = vsyncadd [#allocation11], 0
          %s317 = sshll.u32 %s4, 4
          %s318 = int_to_ptr.hbm [resolvable:$true] %s317
          %s319 = sshll.u32 [#allocation12], 4
          %s320 = int_to_ptr.vmem [resolvable:$true] %s319
          %325 = dma.hbm_to_vmem [thread:$0]  %s318, 1024, %s320, [#allocation11], 64, 64, 4
        $region20: #{tpu_custom_call.1} parent=11 // pred_fallthru
          _
        // Predicated region
        $region21: #{tpu_custom_call.1} parent=11 // pred_check
          %p326 = pneg %p187
        $region22: #{tpu_custom_call.1} parent=11 // pred_check_branch
          %328 = sbr.rel (%p326) target = $region24
        $region23: #{tpu_custom_call.1} parent=11 // pred_region
          _
        $region24: #{tpu_custom_call.1} parent=11 // pred_fallthru
          _
        // Predicated region
        $region25: #{tpu_custom_call.1} parent=11 // pred_check
          %p329 = pneg %p208
        $region26: #{tpu_custom_call.1} parent=11 // pred_check_branch
          %331 = sbr.rel (%p329) target = $region28
        $region27: #{tpu_custom_call.1} parent=11 // pred_region
          %333 = vsyncadd [#allocation14], 0
          %s334 = sshll.u32 %s6, 4
          %s335 = int_to_ptr.hbm [resolvable:$true] %s334
          %s336 = sshll.u32 [#allocation13], 4
          %s337 = int_to_ptr.vmem [resolvable:$true] %s336
          %342 = dma.hbm_to_vmem [thread:$0]  %s335, 1024, %s337, [#allocation14], 64, 64, 4
        $region28: #{tpu_custom_call.1} parent=11 // pred_fallthru
          _
        // Predicated region
        $region29: #{tpu_custom_call.1} parent=11 // pred_check
          %p343 = pneg %p229
        $region30: #{tpu_custom_call.1} parent=11 // pred_check_branch
          %345 = sbr.rel (%p343) target = $region32
        $region31: #{tpu_custom_call.1} parent=11 // pred_region
          _
        $region32: #{tpu_custom_call.1} parent=11 // pred_fallthru
          _
      $region12: #{tpu_custom_call.1} parent=5 // pred_fallthru
        _
      %p346 = scmp.lt.s32.totalorder %s30, 6
      // Predicated region
      $region33: #{tpu_custom_call.1} parent=5 // pred_check
        %p347 = pneg %p346
      $region34: #{tpu_custom_call.1} parent=5 // pred_check_branch
        %349 = sbr.rel (%p347) target = $region36
      $region35: #{tpu_custom_call.1} parent=5 // pred_region
        // Predicated region
        $region37: #{tpu_custom_call.1} parent=35 // pred_check
          %p350 = pneg %p64
        $region38: #{tpu_custom_call.1} parent=35 // pred_check_branch
          %352 = sbr.rel (%p350) target = $region40
        $region39: #{tpu_custom_call.1} parent=35 // pred_region
          #allocation19 [shape = 'u32[6]{0}', space=smem, size = 0x18, scoped, tag = 'DMA stride descriptor']
          %s353 = sand.u32 %s54, 1
          %s354 = scalar_lea.sflag [#allocation5], %s353
          %s355 = sand.u32 %s54, 1
          %s356 = smul.addr %s355, 64
          %s357 = scalar_lea.vmem [#allocation4], %s356
          %s358 = smul.u32 8, %s37
          %s359 = smul.u32 2, %s38
          %361 = vsyncadd %s354, 0
          %s362 = smul.addr %s358, 6
          %s363 = sadd.s32 %s359, %s362
          %s364 = smul.addr %s363, 4
          %s365 = scalar_lea.hbm %s0, %s364
          %s367 = sshll.u32 1, 14
          %s368 = sxor.u32 4294967295, %s367
          %s370 = sld [smem:[#allocation0]]
          %s371 = sadd.s32 2, %s370
          %s373 = sshll.u32 7, 26
          %s374 = sxor.u32 4294967295, %s373
          %s375 = sand.u32 0, %s374
          %s376 = sshll.u32 %s371, 26
          %s377 = sor.u32 %s375, %s376
          %s378 = sshll.u32 %s365, 4
          %s379 = int_to_ptr.hbm [resolvable:$true] %s378
          %s380 = sshll.u32 %s357, 4
          %s381 = int_to_ptr.vmem [resolvable:$true] %s380
          %387 = sst [smem:[#allocation19]] 384
          %s388 = scalar_lea.smem [#allocation19], 1
          %389 = sst [smem:[%s388]] 128
          %s390 = scalar_lea.smem [#allocation19], 2
          %391 = sst [smem:[%s390]] 2
          %s392 = scalar_lea.smem [#allocation19], 3
          %393 = sst [smem:[%s392]] 64
          %s394 = scalar_lea.smem [#allocation19], 4
          %395 = sst [smem:[%s394]] 64
          %s396 = scalar_lea.smem [#allocation19], 5
          %397 = sst [smem:[%s396]] 4
          %399 = dma.general %s379, 1024, %s381, %s354, [#allocation18], [#allocation19], %s377, 0
        $region40: #{tpu_custom_call.1} parent=35 // pred_fallthru
          _
        // Predicated region
        $region41: #{tpu_custom_call.1} parent=35 // pred_check
          %p400 = pneg %p92
        $region42: #{tpu_custom_call.1} parent=35 // pred_check_branch
          %402 = sbr.rel (%p400) target = $region44
        $region43: #{tpu_custom_call.1} parent=35 // pred_region
          #allocation21 [shape = 'u32[6]{0}', space=smem, size = 0x18, scoped, tag = 'DMA stride descriptor']
          %s403 = sand.u32 %s30, 1
          %s404 = scalar_lea.sflag [#allocation8], %s403
          %s405 = sand.u32 %s82, 1
          %s406 = smul.addr %s405, 64
          %s407 = scalar_lea.vmem [#allocation7], %s406
          %s408 = smul.u32 8, %s37
          %s409 = smul.u32 2, %s38
          %411 = vsyncadd %s404, 0
          %s412 = smul.addr %s408, 6
          %s413 = sadd.s32 %s409, %s412
          %s414 = smul.addr %s413, 4
          %s415 = scalar_lea.hbm %s1, %s414
          %s417 = sshll.u32 1, 14
          %s418 = sxor.u32 4294967295, %s417
          %s420 = sld [smem:[#allocation0]]
          %s421 = sadd.s32 2, %s420
          %s423 = sshll.u32 7, 26
          %s424 = sxor.u32 4294967295, %s423
          %s425 = sand.u32 0, %s424
          %s426 = sshll.u32 %s421, 26
          %s427 = sor.u32 %s425, %s426
          %s428 = sshll.u32 %s415, 4
          %s429 = int_to_ptr.hbm [resolvable:$true] %s428
          %s430 = sshll.u32 %s407, 4
          %s431 = int_to_ptr.vmem [resolvable:$true] %s430
          %437 = sst [smem:[#allocation21]] 384
          %s438 = scalar_lea.smem [#allocation21], 1
          %439 = sst [smem:[%s438]] 128
          %s440 = scalar_lea.smem [#allocation21], 2
          %441 = sst [smem:[%s440]] 2
          %s442 = scalar_lea.smem [#allocation21], 3
          %443 = sst [smem:[%s442]] 64
          %s444 = scalar_lea.smem [#allocation21], 4
          %445 = sst [smem:[%s444]] 64
          %s446 = scalar_lea.smem [#allocation21], 5
          %447 = sst [smem:[%s446]] 4
          %449 = dma.general %s429, 1024, %s431, %s404, [#allocation20], [#allocation21], %s427, 0
        $region44: #{tpu_custom_call.1} parent=35 // pred_fallthru
          _
        // Predicated region
        $region45: #{tpu_custom_call.1} parent=35 // pred_check
          %p450 = pneg %p118
        $region46: #{tpu_custom_call.1} parent=35 // pred_check_branch
          %452 = sbr.rel (%p450) target = $region48
        $region47: #{tpu_custom_call.1} parent=35 // pred_region
          %s453 = sand.u32 %s30, 1
          %s454 = scalar_lea.sflag [#allocation8], %s453
          %s455 = sand.u32 %s108, 1
          %s456 = smul.addr %s455, 8
          %s457 = scalar_lea.vmem [#allocation9], %s456
          %459 = vsyncadd %s454, 0
          %s460 = smul.addr %s37, 8
          %s461 = scalar_lea.hbm %s2, %s460
          %s463 = sshll.u32 %s461, 4
          %s464 = int_to_ptr.hbm [resolvable:$true] %s463
          %s465 = sshll.u32 %s457, 4
          %s466 = int_to_ptr.vmem [resolvable:$true] %s465
          %468 = dma.hbm_to_vmem [thread:$0]  %s464, 128, %s466, %s454
        $region48: #{tpu_custom_call.1} parent=35 // pred_fallthru
          _
      $region36: #{tpu_custom_call.1} parent=5 // pred_fallthru
        _
      %p469 = scmp.le.s32.totalorder 1, %s30
      %p470 = scmp.lt.s32.totalorder %s30, 7
      %p471 = pnand %p469, %p470
      %p472 = pneg %p471
      // Predicated region
      $region49: #{tpu_custom_call.1} parent=5 // pred_check
        _
      $region50: #{tpu_custom_call.1} parent=5 // pred_check_branch
        %474 = sbr.rel (%p471) target = $region52
      $region51: #{tpu_custom_call.1} parent=5 // pred_region
        %s475 = ssub.s32 %s30, 1
        %s476 = sand.u32 %s57, 1
        %s477 = scalar_lea.sflag [#allocation5], %s476
        %s478 = sand.u32 %s57, 1
        %s479 = smul.addr %s478, 64
        %s480 = scalar_lea.vmem [#allocation4], %s479
        // Predicated region
        $region53: #{tpu_custom_call.1} parent=51 // pred_check
          %p481 = pneg %p70
        $region54: #{tpu_custom_call.1} parent=51 // pred_check_branch
          %483 = sbr.rel (%p481) target = $region56
        $region55: #{tpu_custom_call.1} parent=51 // pred_region
          %485 = dma.done %s477, 1024
        $region56: #{tpu_custom_call.1} parent=51 // pred_fallthru
          _
        %s486 = sand.u32 %s35, 1
        %s487 = scalar_lea.sflag [#allocation8], %s486
        %s488 = sand.u32 %s85, 1
        %s489 = smul.addr %s488, 64
        %s490 = scalar_lea.vmem [#allocation7], %s489
        // Predicated region
        $region57: #{tpu_custom_call.1} parent=51 // pred_check
          %p491 = pneg %p98
        $region58: #{tpu_custom_call.1} parent=51 // pred_check_branch
          %493 = sbr.rel (%p491) target = $region60
        $region59: #{tpu_custom_call.1} parent=51 // pred_region
          %495 = dma.done %s487, 1024
        $region60: #{tpu_custom_call.1} parent=51 // pred_fallthru
          _
        %s496 = sand.u32 %s35, 1
        %s497 = scalar_lea.sflag [#allocation8], %s496
        %s498 = sand.u32 %s111, 1
        %s499 = smul.addr %s498, 8
        %s500 = scalar_lea.vmem [#allocation9], %s499
        // Predicated region
        $region61: #{tpu_custom_call.1} parent=51 // pred_check
          %p501 = pneg %p124
        $region62: #{tpu_custom_call.1} parent=51 // pred_check_branch
          %503 = sbr.rel (%p501) target = $region64
        $region63: #{tpu_custom_call.1} parent=51 // pred_region
          %505 = dma.done %s497, 128
        $region64: #{tpu_custom_call.1} parent=51 // pred_fallthru
          _
        // Predicated region
        $region65: #{tpu_custom_call.1} parent=51 // pred_check
          %p506 = pneg %p145
        $region66: #{tpu_custom_call.1} parent=51 // pred_check_branch
          %508 = sbr.rel (%p506) target = $region68
        $region67: #{tpu_custom_call.1} parent=51 // pred_region
          %510 = dma.done [#allocation11], 1024
        $region68: #{tpu_custom_call.1} parent=51 // pred_fallthru
          _
        // Predicated region
        $region69: #{tpu_custom_call.1} parent=51 // pred_check
          %p511 = pneg %p166
        $region70: #{tpu_custom_call.1} parent=51 // pred_check_branch
          %513 = sbr.rel (%p511) target = $region72
        $region71: #{tpu_custom_call.1} parent=51 // pred_region
          %515 = dma.done [#allocation11], 1024
        $region72: #{tpu_custom_call.1} parent=51 // pred_fallthru
          _
        // Predicated region
        $region73: #{tpu_custom_call.1} parent=51 // pred_check
          %p516 = pneg %p208
        $region74: #{tpu_custom_call.1} parent=51 // pred_check_branch
          %518 = sbr.rel (%p516) target = $region76
        $region75: #{tpu_custom_call.1} parent=51 // pred_region
          %520 = dma.done [#allocation14], 1024
        $region76: #{tpu_custom_call.1} parent=51 // pred_fallthru
          _
        %s521 = sand.u32 %s57, 1
        %s522 = scalar_lea.sflag [#allocation5], %s521
        %s523 = sand.u32 %s57, 1
        %s524 = smul.addr %s523, 64
        %s525 = scalar_lea.vmem [#allocation4], %s524
        %p526 = pneg %p70
        %p527 = pneg %p67
        %s528 = sand.u32 %s35, 1
        %s529 = scalar_lea.sflag [#allocation8], %s528
        %s530 = sand.u32 %s85, 1
        %s531 = smul.addr %s530, 64
        %s532 = scalar_lea.vmem [#allocation7], %s531
        %p533 = pneg %p98
        %p534 = pneg %p95
        %s535 = sand.u32 %s35, 1
        %s536 = scalar_lea.sflag [#allocation8], %s535
        %s537 = sand.u32 %s111, 1
        %s538 = smul.addr %s537, 8
        %s539 = scalar_lea.vmem [#allocation9], %s538
        %p540 = pneg %p124
        %p541 = pneg %p121
        %p542 = pneg %p145
        %p543 = pneg %p142
        %p544 = pneg %p166
        %p545 = pneg %p163
        %p546 = pneg %p187
        %p547 = pneg %p184
        %p548 = pneg %p208
        %p549 = pneg %p205
        %p550 = pneg %p229
        %p551 = pneg %p226
        %p552 = pneg %p257
        %p553 = pneg %p254
        %s554 = sand.u32 %s244, 1
        %s555 = scalar_lea.sflag [#allocation6], %s554
        %s556 = sand.u32 %s244, 1
        %s557 = smul.addr %s556, 128
        %s558 = scalar_lea.vmem [#allocation15], %s557
        %p559 = pneg %p283
        %p560 = pneg %p280
        %s561 = sand.u32 %s270, 1
        %s562 = scalar_lea.sflag [#allocation17], %s561
        %s563 = sand.u32 %s270, 1
        %s564 = smul.addr %s563, 8
        %s565 = scalar_lea.vmem [#allocation16], %s564
        %s566 = smul.u32 8, %s39
        %s567 = smul.u32 2, %s40
        %s568 = smul.u32 8, %s39
        %s569 = smul.u32 2, %s40
        %s570 = smul.u32 8, %s39
        %s571 = smul.u32 2, %s40
        %p572 = scmp.eq.s32.totalorder %s40, 0
        // Predicated region
        $region77: #{tpu_custom_call.1} parent=51 // pred_check
          %p573 = pneg %p572
        $region78: #{tpu_custom_call.1} parent=51 // pred_check_branch
          %575 = sbr.rel (%p573) target = $region80
        $region79: #{tpu_custom_call.1} parent=51 // pred_region
          %v576 = vld [vmem:[%s500] sm:$0xff]
          %577 = vst [vmem:[#allocation2] sm:$0xff] %v576
        $region80: #{tpu_custom_call.1} parent=51 // pred_fallthru
          _
        %v578 = vld [vmem:[%s480] sm:$0xf]
        %v579 = vld [vmem:[%s480 + $0x4] sm:$0xf]
        %v580 = vld [vmem:[%s480 + $0x8] sm:$0xf]
        %v581 = vld [vmem:[%s480 + $0xc] sm:$0xf]
        %v582 = vld [vmem:[%s480 + $0x10] sm:$0xf]
        %v583 = vld [vmem:[%s480 + $0x14] sm:$0xf]
        %v584 = vld [vmem:[%s480 + $0x18] sm:$0xf]
        %v585 = vld [vmem:[%s480 + $0x1c] sm:$0xf]
        %v586 = vld [vmem:[%s480 + $0x20] sm:$0xf]
        %v587 = vld [vmem:[%s480 + $0x24] sm:$0xf]
        %v588 = vld [vmem:[%s480 + $0x28] sm:$0xf]
        %v589 = vld [vmem:[%s480 + $0x2c] sm:$0xf]
        %v590 = vld [vmem:[%s480 + $0x30] sm:$0xf]
        %v591 = vld [vmem:[%s480 + $0x34] sm:$0xf]
        %v592 = vld [vmem:[%s480 + $0x38] sm:$0xf]
        %v593 = vld [vmem:[%s480 + $0x3c] sm:$0xf]
        %v594 = vld [vmem:[#allocation10] sm:$0xf]
        %v595 = vld [vmem:[#allocation10 + $0x4] sm:$0xf]
        %v596 = vld [vmem:[#allocation10 + $0x8] sm:$0xf]
        %v597 = vld [vmem:[#allocation10 + $0xc] sm:$0xf]
        %v598 = vld [vmem:[#allocation10 + $0x10] sm:$0xf]
        %v599 = vld [vmem:[#allocation10 + $0x14] sm:$0xf]
        %v600 = vld [vmem:[#allocation10 + $0x18] sm:$0xf]
        %v601 = vld [vmem:[#allocation10 + $0x1c] sm:$0xf]
        %v602 = vld [vmem:[#allocation10 + $0x20] sm:$0xf]
        %v603 = vld [vmem:[#allocation10 + $0x24] sm:$0xf]
        %v604 = vld [vmem:[#allocation10 + $0x28] sm:$0xf]
        %v605 = vld [vmem:[#allocation10 + $0x2c] sm:$0xf]
        %v606 = vld [vmem:[#allocation10 + $0x30] sm:$0xf]
        %v607 = vld [vmem:[#allocation10 + $0x34] sm:$0xf]
        %v608 = vld [vmem:[#allocation10 + $0x38] sm:$0xf]
        %v609 = vld [vmem:[#allocation10 + $0x3c] sm:$0xf]
        %v610 = vld [vmem:[%s5] sm:$0x1]
        %v612 = vperm.slane %v610, 0
        %v630 = vunpack.c.l.b16 %v578
        %v631 = vunpack.c.l.b16 %v579
        %v632 = vunpack.c.l.b16 %v580
        %v633 = vunpack.c.l.b16 %v581
        %v634 = vunpack.c.l.b16 %v582
        %v635 = vunpack.c.l.b16 %v583
        %v636 = vunpack.c.l.b16 %v584
        %v637 = vunpack.c.l.b16 %v585
        %v638 = vunpack.c.l.b16 %v586
        %v639 = vunpack.c.l.b16 %v587
        %v640 = vunpack.c.l.b16 %v588
        %v641 = vunpack.c.l.b16 %v589
        %v642 = vunpack.c.l.b16 %v590
        %v643 = vunpack.c.l.b16 %v591
        %v644 = vunpack.c.l.b16 %v592
        %v645 = vunpack.c.l.b16 %v593
        %v646 = vpack.c.b16 %v631, %v630
        %v647 = vpack.c.b16 %v633, %v632
        %v648 = vpack.c.b16 %v635, %v634
        %v649 = vpack.c.b16 %v637, %v636
        %v650 = vpack.c.b16 %v639, %v638
        %v651 = vpack.c.b16 %v641, %v640
        %v652 = vpack.c.b16 %v643, %v642
        %v653 = vpack.c.b16 %v645, %v644
        %v678 = vunpack.c.l.b16 %v594
        %v679 = vunpack.c.l.b16 %v595
        %v680 = vunpack.c.l.b16 %v596
        %v681 = vunpack.c.l.b16 %v597
        %v682 = vunpack.c.l.b16 %v598
        %v683 = vunpack.c.l.b16 %v599
        %v684 = vunpack.c.l.b16 %v600
        %v685 = vunpack.c.l.b16 %v601
        %v686 = vunpack.c.l.b16 %v602
        %v687 = vunpack.c.l.b16 %v603
        %v688 = vunpack.c.l.b16 %v604
        %v689 = vunpack.c.l.b16 %v605
        %v690 = vunpack.c.l.b16 %v606
        %v691 = vunpack.c.l.b16 %v607
        %v692 = vunpack.c.l.b16 %v608
        %v693 = vunpack.c.l.b16 %v609
        %v694 = vpack.c.b16 %v679, %v678
        %v695 = vpack.c.b16 %v681, %v680
        %v696 = vpack.c.b16 %v683, %v682
        %v697 = vpack.c.b16 %v685, %v684
        %v698 = vpack.c.b16 %v687, %v686
        %v699 = vpack.c.b16 %v689, %v688
        %v700 = vpack.c.b16 %v691, %v690
        %v701 = vpack.c.b16 %v693, %v692
        %710 = vmatpush.bf16.msra.mxu0 %v701
        %711 = vmatpush.bf16.msra.mxu0 %v700
        %712 = vmatpush.bf16.msra.mxu0 %v699
        %713 = vmatpush.bf16.msra.mxu0 %v698
        %714 = vmatpush.bf16.msra.mxu0 %v697
        %715 = vmatpush.bf16.msra.mxu0 %v696
        %716 = vmatpush.bf16.msra.mxu0 %v695
        %717 = vmatpush.bf16.msra.mxu0 %v694
        %718 = vmatmul.bf16.gmra.mxu0 %v646
        %v719 = vpop.f32.mrf.mxu0
        %v720 = vadd.f32 %v612, %v719
        %v721 = vpop.f32.mrf.mxu0
        %v722 = vadd.f32 %v612, %v721
        %723 = vmatmul.bf16.gmra.mxu0 %v647
        %v724 = vpop.f32.mrf.mxu0
        %v725 = vadd.f32 %v612, %v724
        %v726 = vpop.f32.mrf.mxu0
        %v727 = vadd.f32 %v612, %v726
        %728 = vmatmul.bf16.gmra.mxu0 %v648
        %v729 = vpop.f32.mrf.mxu0
        %v730 = vadd.f32 %v612, %v729
        %v731 = vpop.f32.mrf.mxu0
        %v732 = vadd.f32 %v612, %v731
        %733 = vmatmul.bf16.gmra.mxu0 %v649
        %v734 = vpop.f32.mrf.mxu0
        %v735 = vadd.f32 %v612, %v734
        %v736 = vpop.f32.mrf.mxu0
        %v737 = vadd.f32 %v612, %v736
        %738 = vmatmul.bf16.gmra.mxu0 %v650
        %v739 = vpop.f32.mrf.mxu0
        %v740 = vadd.f32 %v612, %v739
        %v741 = vpop.f32.mrf.mxu0
        %v742 = vadd.f32 %v612, %v741
        %743 = vmatmul.bf16.gmra.mxu0 %v651
        %v744 = vpop.f32.mrf.mxu0
        %v745 = vadd.f32 %v612, %v744
        %v746 = vpop.f32.mrf.mxu0
        %v747 = vadd.f32 %v612, %v746
        %748 = vmatmul.bf16.gmra.mxu0 %v652
        %v749 = vpop.f32.mrf.mxu0
        %v750 = vadd.f32 %v612, %v749
        %v751 = vpop.f32.mrf.mxu0
        %v752 = vadd.f32 %v612, %v751
        %753 = vmatmul.bf16.gmra.mxu0 %v653
        %v754 = vpop.f32.mrf.mxu0
        %v755 = vadd.f32 %v612, %v754
        %v756 = vpop.f32.mrf.mxu0
        %v757 = vadd.f32 %v612, %v756
        %758 = vdwg.mxu0
        %759 = vst [vmem:[#allocation3] sm:$0xff] %v720
        %760 = vst [vmem:[#allocation3 + $0x8] sm:$0xff] %v722
        %761 = vst [vmem:[#allocation3 + $0x10] sm:$0xff] %v725
        %762 = vst [vmem:[#allocation3 + $0x18] sm:$0xff] %v727
        %763 = vst [vmem:[#allocation3 + $0x20] sm:$0xff] %v730
        %764 = vst [vmem:[#allocation3 + $0x28] sm:$0xff] %v732
        %765 = vst [vmem:[#allocation3 + $0x30] sm:$0xff] %v735
        %766 = vst [vmem:[#allocation3 + $0x38] sm:$0xff] %v737
        %767 = vst [vmem:[#allocation3 + $0x40] sm:$0xff] %v740
        %768 = vst [vmem:[#allocation3 + $0x48] sm:$0xff] %v742
        %769 = vst [vmem:[#allocation3 + $0x50] sm:$0xff] %v745
        %770 = vst [vmem:[#allocation3 + $0x58] sm:$0xff] %v747
        %771 = vst [vmem:[#allocation3 + $0x60] sm:$0xff] %v750
        %772 = vst [vmem:[#allocation3 + $0x68] sm:$0xff] %v752
        %773 = vst [vmem:[#allocation3 + $0x70] sm:$0xff] %v755
        %774 = vst [vmem:[#allocation3 + $0x78] sm:$0xff] %v757
        %v775 = vld [vmem:[#allocation12] sm:$0xf]
        %v776 = vld [vmem:[#allocation12 + $0x4] sm:$0xf]
        %v777 = vld [vmem:[#allocation12 + $0x8] sm:$0xf]
        %v778 = vld [vmem:[#allocation12 + $0xc] sm:$0xf]
        %v779 = vld [vmem:[#allocation12 + $0x10] sm:$0xf]
        %v780 = vld [vmem:[#allocation12 + $0x14] sm:$0xf]
        %v781 = vld [vmem:[#allocation12 + $0x18] sm:$0xf]
        %v782 = vld [vmem:[#allocation12 + $0x1c] sm:$0xf]
        %v783 = vld [vmem:[#allocation12 + $0x20] sm:$0xf]
        %v784 = vld [vmem:[#allocation12 + $0x24] sm:$0xf]
        %v785 = vld [vmem:[#allocation12 + $0x28] sm:$0xf]
        %v786 = vld [vmem:[#allocation12 + $0x2c] sm:$0xf]
        %v787 = vld [vmem:[#allocation12 + $0x30] sm:$0xf]
        %v788 = vld [vmem:[#allocation12 + $0x34] sm:$0xf]
        %v789 = vld [vmem:[#allocation12 + $0x38] sm:$0xf]
        %v790 = vld [vmem:[#allocation12 + $0x3c] sm:$0xf]
        %v791 = vld [vmem:[#allocation2] sm:$0xff]
        %v792 = vld [vmem:[#allocation3] sm:$0x1]
        %v793 = vld [vmem:[#allocation3 + $0x10] sm:$0x1]
        %v794 = vld [vmem:[#allocation3 + $0x20] sm:$0x1]
        %v795 = vld [vmem:[#allocation3 + $0x30] sm:$0x1]
        %v796 = vld [vmem:[#allocation3 + $0x40] sm:$0x1]
        %v797 = vld [vmem:[#allocation3 + $0x50] sm:$0x1]
        %v798 = vld [vmem:[#allocation3 + $0x60] sm:$0x1]
        %v799 = vld [vmem:[#allocation3 + $0x70] sm:$0x1]
        %v800 = vpack.c.bf16 %v791, %v791
        %v817 = vunpack.c.l.b16 %v775
        %v818 = vunpack.c.l.b16 %v776
        %v819 = vunpack.c.l.b16 %v777
        %v820 = vunpack.c.l.b16 %v778
        %v821 = vunpack.c.l.b16 %v779
        %v822 = vunpack.c.l.b16 %v780
        %v823 = vunpack.c.l.b16 %v781
        %v824 = vunpack.c.l.b16 %v782
        %v825 = vunpack.c.l.b16 %v783
        %v826 = vunpack.c.l.b16 %v784
        %v827 = vunpack.c.l.b16 %v785
        %v828 = vunpack.c.l.b16 %v786
        %v829 = vunpack.c.l.b16 %v787
        %v830 = vunpack.c.l.b16 %v788
        %v831 = vunpack.c.l.b16 %v789
        %v832 = vunpack.c.l.b16 %v790
        %v833 = vpack.c.b16 %v818, %v817
        %v834 = vpack.c.b16 %v820, %v819
        %v835 = vpack.c.b16 %v822, %v821
        %v836 = vpack.c.b16 %v824, %v823
        %v837 = vpack.c.b16 %v826, %v825
        %v838 = vpack.c.b16 %v828, %v827
        %v839 = vpack.c.b16 %v830, %v829
        %v840 = vpack.c.b16 %v832, %v831
        %849 = vmatpush.bf16.msra.mxu0 %v840
        %850 = vmatpush.bf16.msra.mxu0 %v839
        %851 = vmatpush.bf16.msra.mxu0 %v838
        %852 = vmatpush.bf16.msra.mxu0 %v837
        %853 = vmatpush.bf16.msra.mxu0 %v836
        %854 = vmatpush.bf16.msra.mxu0 %v835
        %855 = vmatpush.bf16.msra.mxu0 %v834
        %856 = vmatpush.bf16.msra.mxu0 %v833
        %857 = vmatmul.bf16.gmra.mxu0 %v800
        %v858 = vpop.f32.mrf.mxu0
        %v859 = vadd.f32 0.0, %v858
        %v860 = vpop.f32.mrf.mxu0
        %861 = vdwg.mxu0
        %v863 = vrot.slane %v859, 1
        %v864 = vrot.slane %v859, 2
        %v865 = vrot.slane %v859, 3
        %v866 = vrot.slane %v859, 4
        %v867 = vrot.slane %v859, 5
        %v868 = vrot.slane %v859, 6
        %v869 = vrot.slane %v859, 7
        %v878 = vadd.f32 %v792, %v859
        %v879 = vadd.f32 %v793, %v863
        %v880 = vadd.f32 %v794, %v864
        %v881 = vadd.f32 %v795, %v865
        %v882 = vadd.f32 %v796, %v866
        %v883 = vadd.f32 %v797, %v867
        %v884 = vadd.f32 %v798, %v868
        %v885 = vadd.f32 %v799, %v869
        %v886 = vtanh.pop %v878
        %v887 = vtanh.pop %v879
        %v888 = vtanh.pop %v880
        %v889 = vtanh.pop %v881
        %v890 = vtanh.pop %v882
        %v891 = vtanh.pop %v883
        %v892 = vtanh.pop %v884
        %v893 = vtanh.pop %v885
        %894 = vst [vmem:[#allocation3] sm:$0x1] %v886
        %895 = vst [vmem:[#allocation3 + $0x10] sm:$0x1] %v887
        %896 = vst [vmem:[#allocation3 + $0x20] sm:$0x1] %v888
        %897 = vst [vmem:[#allocation3 + $0x30] sm:$0x1] %v889
        %898 = vst [vmem:[#allocation3 + $0x40] sm:$0x1] %v890
        %899 = vst [vmem:[#allocation3 + $0x50] sm:$0x1] %v891
        %900 = vst [vmem:[#allocation3 + $0x60] sm:$0x1] %v892
        %901 = vst [vmem:[#allocation3 + $0x70] sm:$0x1] %v893
        %v902 = vld [vmem:[#allocation3 + $0x1] sm:$0x1]
        %v903 = vld [vmem:[#allocation3 + $0x11] sm:$0x1]
        %v904 = vld [vmem:[#allocation3 + $0x21] sm:$0x1]
        %v905 = vld [vmem:[#allocation3 + $0x31] sm:$0x1]
        %v906 = vld [vmem:[#allocation3 + $0x41] sm:$0x1]
        %v907 = vld [vmem:[#allocation3 + $0x51] sm:$0x1]
        %v908 = vld [vmem:[#allocation3 + $0x61] sm:$0x1]
        %v909 = vld [vmem:[#allocation3 + $0x71] sm:$0x1]
        %v910 = vpack.c.bf16 %v886, %v886
        %v911 = vpack.c.bf16 %v887, %v887
        %v912 = vpack.c.bf16 %v888, %v888
        %v913 = vpack.c.bf16 %v889, %v889
        %v914 = vpack.c.bf16 %v890, %v890
        %v915 = vpack.c.bf16 %v891, %v891
        %v916 = vpack.c.bf16 %v892, %v892
        %v917 = vpack.c.bf16 %v893, %v893
        %v926 = vunpack.c.l.b16 %v910
        %v927 = vunpack.c.l.b16 %v911
        %v928 = vunpack.c.l.b16 %v912
        %v929 = vunpack.c.l.b16 %v913
        %v930 = vunpack.c.l.b16 %v914
        %v931 = vunpack.c.l.b16 %v915
        %v932 = vunpack.c.l.b16 %v916
        %v933 = vunpack.c.l.b16 %v917
        %v934 = vrot.slane %v927, 7
        %vm935 = vcmask 1041409
        %v936 = vsel %vm935, %v934, %v926
        %v937 = vrot.slane %v928, 6
        %vm938 = vcmask 1042434
        %v939 = vsel %vm938, %v937, %v936
        %v940 = vrot.slane %v929, 5
        %vm941 = vcmask 1043459
        %v942 = vsel %vm941, %v940, %v939
        %v943 = vrot.slane %v930, 4
        %vm944 = vcmask 1044484
        %v945 = vsel %vm944, %v943, %v942
        %v946 = vrot.slane %v931, 3
        %vm947 = vcmask 1045509
        %v948 = vsel %vm947, %v946, %v945
        %v949 = vrot.slane %v932, 2
        %vm950 = vcmask 1046534
        %v951 = vsel %vm950, %v949, %v948
        %v952 = vrot.slane %v933, 1
        %vm953 = vcmask 1047559
        %v954 = vsel %vm953, %v952, %v951
        %v955 = vpack.c.b16 %v954, %v954
        %957 = vmatpush.bf16.msra.mxu0 %v840
        %958 = vmatpush.bf16.msra.mxu0 %v839
        %959 = vmatpush.bf16.msra.mxu0 %v838
        %960 = vmatpush.bf16.msra.mxu0 %v837
        %961 = vmatpush.bf16.msra.mxu0 %v836
        %962 = vmatpush.bf16.msra.mxu0 %v835
        %963 = vmatpush.bf16.msra.mxu0 %v834
        %964 = vmatpush.bf16.msra.mxu0 %v833
        %965 = vmatmul.bf16.gmra.mxu0 %v955
        %v966 = vpop.f32.mrf.mxu0
        %v967 = vadd.f32 0.0, %v966
        %v968 = vpop.f32.mrf.mxu0
        %969 = vdwg.mxu0
        %v971 = vrot.slane %v967, 1
        %v972 = vrot.slane %v967, 2
        %v973 = vrot.slane %v967, 3
        %v974 = vrot.slane %v967, 4
        %v975 = vrot.slane %v967, 5
        %v976 = vrot.slane %v967, 6
        %v977 = vrot.slane %v967, 7
        %v986 = vadd.f32 %v902, %v967
        %v987 = vadd.f32 %v903, %v971
        %v988 = vadd.f32 %v904, %v972
        %v989 = vadd.f32 %v905, %v973
        %v990 = vadd.f32 %v906, %v974
        %v991 = vadd.f32 %v907, %v975
        %v992 = vadd.f32 %v908, %v976
        %v993 = vadd.f32 %v909, %v977
        %v994 = vtanh.pop %v986
        %v995 = vtanh.pop %v987
        %v996 = vtanh.pop %v988
        %v997 = vtanh.pop %v989
        %v998 = vtanh.pop %v990
        %v999 = vtanh.pop %v991
        %v1000 = vtanh.pop %v992
        %v1001 = vtanh.pop %v993
        %1002 = vst [vmem:[#allocation3 + $0x1] sm:$0x1] %v994
        %1003 = vst [vmem:[#allocation3 + $0x11] sm:$0x1] %v995
        %1004 = vst [vmem:[#allocation3 + $0x21] sm:$0x1] %v996
        %1005 = vst [vmem:[#allocation3 + $0x31] sm:$0x1] %v997
        %1006 = vst [vmem:[#allocation3 + $0x41] sm:$0x1] %v998
        %1007 = vst [vmem:[#allocation3 + $0x51] sm:$0x1] %v999
        %1008 = vst [vmem:[#allocation3 + $0x61] sm:$0x1] %v1000
        %1009 = vst [vmem:[#allocation3 + $0x71] sm:$0x1] %v1001
        %v1010 = vld [vmem:[#allocation3 + $0x2] sm:$0x1]
        %v1011 = vld [vmem:[#allocation3 + $0x12] sm:$0x1]
        %v1012 = vld [vmem:[#allocation3 + $0x22] sm:$0x1]
        %v1013 = vld [vmem:[#allocation3 + $0x32] sm:$0x1]
        %v1014 = vld [vmem:[#allocation3 + $0x42] sm:$0x1]
        %v1015 = vld [vmem:[#allocation3 + $0x52] sm:$0x1]
        %v1016 = vld [vmem:[#allocation3 + $0x62] sm:$0x1]
        %v1017 = vld [vmem:[#allocation3 + $0x72] sm:$0x1]
        %v1018 = vpack.c.bf16 %v994, %v994
        %v1019 = vpack.c.bf16 %v995, %v995
        %v1020 = vpack.c.bf16 %v996, %v996
        %v1021 = vpack.c.bf16 %v997, %v997
        %v1022 = vpack.c.bf16 %v998, %v998
        %v1023 = vpack.c.bf16 %v999, %v999
        %v1024 = vpack.c.bf16 %v1000, %v1000
        %v1025 = vpack.c.bf16 %v1001, %v1001
        %v1034 = vunpack.c.l.b16 %v1018
        %v1035 = vunpack.c.l.b16 %v1019
        %v1036 = vunpack.c.l.b16 %v1020
        %v1037 = vunpack.c.l.b16 %v1021
        %v1038 = vunpack.c.l.b16 %v1022
        %v1039 = vunpack.c.l.b16 %v1023
        %v1040 = vunpack.c.l.b16 %v1024
        %v1041 = vunpack.c.l.b16 %v1025
        %v1042 = vrot.slane %v1035, 7
        %v1043 = vsel %vm935, %v1042, %v1034
        %v1044 = vrot.slane %v1036, 6
        %v1045 = vsel %vm938, %v1044, %v1043
        %v1046 = vrot.slane %v1037, 5
        %v1047 = vsel %vm941, %v1046, %v1045
        %v1048 = vrot.slane %v1038, 4
        %v1049 = vsel %vm944, %v1048, %v1047
        %v1050 = vrot.slane %v1039, 3
        %v1051 = vsel %vm947, %v1050, %v1049
        %v1052 = vrot.slane %v1040, 2
        %v1053 = vsel %vm950, %v1052, %v1051
        %v1054 = vrot.slane %v1041, 1
        %v1055 = vsel %vm953, %v1054, %v1053
        %v1056 = vpack.c.b16 %v1055, %v1055
        %1058 = vmatpush.bf16.msra.mxu0 %v840
        %1059 = vmatpush.bf16.msra.mxu0 %v839
        %1060 = vmatpush.bf16.msra.mxu0 %v838
        %1061 = vmatpush.bf16.msra.mxu0 %v837
        %1062 = vmatpush.bf16.msra.mxu0 %v836
        %1063 = vmatpush.bf16.msra.mxu0 %v835
        %1064 = vmatpush.bf16.msra.mxu0 %v834
        %1065 = vmatpush.bf16.msra.mxu0 %v833
        %1066 = vmatmul.bf16.gmra.mxu0 %v1056
        %v1067 = vpop.f32.mrf.mxu0
        %v1068 = vadd.f32 0.0, %v1067
        %v1069 = vpop.f32.mrf.mxu0
        %1070 = vdwg.mxu0
        %v1072 = vrot.slane %v1068, 1
        %v1073 = vrot.slane %v1068, 2
        %v1074 = vrot.slane %v1068, 3
        %v1075 = vrot.slane %v1068, 4
        %v1076 = vrot.slane %v1068, 5
        %v1077 = vrot.slane %v1068, 6
        %v1078 = vrot.slane %v1068, 7
        %v1087 = vadd.f32 %v1010, %v1068
        %v1088 = vadd.f32 %v1011, %v1072
        %v1089 = vadd.f32 %v1012, %v1073
        %v1090 = vadd.f32 %v1013, %v1074
        %v1091 = vadd.f32 %v1014, %v1075
        %v1092 = vadd.f32 %v1015, %v1076
        %v1093 = vadd.f32 %v1016, %v1077
        %v1094 = vadd.f32 %v1017, %v1078
        %v1095 = vtanh.pop %v1087
        %v1096 = vtanh.pop %v1088
        %v1097 = vtanh.pop %v1089
        %v1098 = vtanh.pop %v1090
        %v1099 = vtanh.pop %v1091
        %v1100 = vtanh.pop %v1092
        %v1101 = vtanh.pop %v1093
        %v1102 = vtanh.pop %v1094
        %1103 = vst [vmem:[#allocation3 + $0x2] sm:$0x1] %v1095
        %1104 = vst [vmem:[#allocation3 + $0x12] sm:$0x1] %v1096
        %1105 = vst [vmem:[#allocation3 + $0x22] sm:$0x1] %v1097
        %1106 = vst [vmem:[#allocation3 + $0x32] sm:$0x1] %v1098
        %1107 = vst [vmem:[#allocation3 + $0x42] sm:$0x1] %v1099
        %1108 = vst [vmem:[#allocation3 + $0x52] sm:$0x1] %v1100
        %1109 = vst [vmem:[#allocation3 + $0x62] sm:$0x1] %v1101
        %1110 = vst [vmem:[#allocation3 + $0x72] sm:$0x1] %v1102
        %v1111 = vld [vmem:[#allocation3 + $0x3] sm:$0x1]
        %v1112 = vld [vmem:[#allocation3 + $0x13] sm:$0x1]
        %v1113 = vld [vmem:[#allocation3 + $0x23] sm:$0x1]
        %v1114 = vld [vmem:[#allocation3 + $0x33] sm:$0x1]
        %v1115 = vld [vmem:[#allocation3 + $0x43] sm:$0x1]
        %v1116 = vld [vmem:[#allocation3 + $0x53] sm:$0x1]
        %v1117 = vld [vmem:[#allocation3 + $0x63] sm:$0x1]
        %v1118 = vld [vmem:[#allocation3 + $0x73] sm:$0x1]
        %v1119 = vpack.c.bf16 %v1095, %v1095
        %v1120 = vpack.c.bf16 %v1096, %v1096
        %v1121 = vpack.c.bf16 %v1097, %v1097
        %v1122 = vpack.c.bf16 %v1098, %v1098
        %v1123 = vpack.c.bf16 %v1099, %v1099
        %v1124 = vpack.c.bf16 %v1100, %v1100
        %v1125 = vpack.c.bf16 %v1101, %v1101
        %v1126 = vpack.c.bf16 %v1102, %v1102
        %v1135 = vunpack.c.l.b16 %v1119
        %v1136 = vunpack.c.l.b16 %v1120
        %v1137 = vunpack.c.l.b16 %v1121
        %v1138 = vunpack.c.l.b16 %v1122
        %v1139 = vunpack.c.l.b16 %v1123
        %v1140 = vunpack.c.l.b16 %v1124
        %v1141 = vunpack.c.l.b16 %v1125
        %v1142 = vunpack.c.l.b16 %v1126
        %v1143 = vrot.slane %v1136, 7
        %v1144 = vsel %vm935, %v1143, %v1135
        %v1145 = vrot.slane %v1137, 6
        %v1146 = vsel %vm938, %v1145, %v1144
        %v1147 = vrot.slane %v1138, 5
        %v1148 = vsel %vm941, %v1147, %v1146
        %v1149 = vrot.slane %v1139, 4
        %v1150 = vsel %vm944, %v1149, %v1148
        %v1151 = vrot.slane %v1140, 3
        %v1152 = vsel %vm947, %v1151, %v1150
        %v1153 = vrot.slane %v1141, 2
        %v1154 = vsel %vm950, %v1153, %v1152
        %v1155 = vrot.slane %v1142, 1
        %v1156 = vsel %vm953, %v1155, %v1154
        %v1157 = vpack.c.b16 %v1156, %v1156
        %1159 = vmatpush.bf16.msra.mxu0 %v840
        %1160 = vmatpush.bf16.msra.mxu0 %v839
        %1161 = vmatpush.bf16.msra.mxu0 %v838
        %1162 = vmatpush.bf16.msra.mxu0 %v837
        %1163 = vmatpush.bf16.msra.mxu0 %v836
        %1164 = vmatpush.bf16.msra.mxu0 %v835
        %1165 = vmatpush.bf16.msra.mxu0 %v834
        %1166 = vmatpush.bf16.msra.mxu0 %v833
        %1167 = vmatmul.bf16.gmra.mxu0 %v1157
        %v1168 = vpop.f32.mrf.mxu0
        %v1169 = vadd.f32 0.0, %v1168
        %v1170 = vpop.f32.mrf.mxu0
        %1171 = vdwg.mxu0
        %v1173 = vrot.slane %v1169, 1
        %v1174 = vrot.slane %v1169, 2
        %v1175 = vrot.slane %v1169, 3
        %v1176 = vrot.slane %v1169, 4
        %v1177 = vrot.slane %v1169, 5
        %v1178 = vrot.slane %v1169, 6
        %v1179 = vrot.slane %v1169, 7
        %v1188 = vadd.f32 %v1111, %v1169
        %v1189 = vadd.f32 %v1112, %v1173
        %v1190 = vadd.f32 %v1113, %v1174
        %v1191 = vadd.f32 %v1114, %v1175
        %v1192 = vadd.f32 %v1115, %v1176
        %v1193 = vadd.f32 %v1116, %v1177
        %v1194 = vadd.f32 %v1117, %v1178
        %v1195 = vadd.f32 %v1118, %v1179
        %v1196 = vtanh.pop %v1188
        %v1197 = vtanh.pop %v1189
        %v1198 = vtanh.pop %v1190
        %v1199 = vtanh.pop %v1191
        %v1200 = vtanh.pop %v1192
        %v1201 = vtanh.pop %v1193
        %v1202 = vtanh.pop %v1194
        %v1203 = vtanh.pop %v1195
        %1204 = vst [vmem:[#allocation3 + $0x3] sm:$0x1] %v1196
        %1205 = vst [vmem:[#allocation3 + $0x13] sm:$0x1] %v1197
        %1206 = vst [vmem:[#allocation3 + $0x23] sm:$0x1] %v1198
        %1207 = vst [vmem:[#allocation3 + $0x33] sm:$0x1] %v1199
        %1208 = vst [vmem:[#allocation3 + $0x43] sm:$0x1] %v1200
        %1209 = vst [vmem:[#allocation3 + $0x53] sm:$0x1] %v1201
        %1210 = vst [vmem:[#allocation3 + $0x63] sm:$0x1] %v1202
        %1211 = vst [vmem:[#allocation3 + $0x73] sm:$0x1] %v1203
        %v1212 = vld [vmem:[#allocation3 + $0x4] sm:$0x1]
        %v1213 = vld [vmem:[#allocation3 + $0x14] sm:$0x1]
        %v1214 = vld [vmem:[#allocation3 + $0x24] sm:$0x1]
        %v1215 = vld [vmem:[#allocation3 + $0x34] sm:$0x1]
        %v1216 = vld [vmem:[#allocation3 + $0x44] sm:$0x1]
        %v1217 = vld [vmem:[#allocation3 + $0x54] sm:$0x1]
        %v1218 = vld [vmem:[#allocation3 + $0x64] sm:$0x1]
        %v1219 = vld [vmem:[#allocation3 + $0x74] sm:$0x1]
        %v1220 = vpack.c.bf16 %v1196, %v1196
        %v1221 = vpack.c.bf16 %v1197, %v1197
        %v1222 = vpack.c.bf16 %v1198, %v1198
        %v1223 = vpack.c.bf16 %v1199, %v1199
        %v1224 = vpack.c.bf16 %v1200, %v1200
        %v1225 = vpack.c.bf16 %v1201, %v1201
        %v1226 = vpack.c.bf16 %v1202, %v1202
        %v1227 = vpack.c.bf16 %v1203, %v1203
        %v1236 = vunpack.c.l.b16 %v1220
        %v1237 = vunpack.c.l.b16 %v1221
        %v1238 = vunpack.c.l.b16 %v1222
        %v1239 = vunpack.c.l.b16 %v1223
        %v1240 = vunpack.c.l.b16 %v1224
        %v1241 = vunpack.c.l.b16 %v1225
        %v1242 = vunpack.c.l.b16 %v1226
        %v1243 = vunpack.c.l.b16 %v1227
        %v1244 = vrot.slane %v1237, 7
        %v1245 = vsel %vm935, %v1244, %v1236
        %v1246 = vrot.slane %v1238, 6
        %v1247 = vsel %vm938, %v1246, %v1245
        %v1248 = vrot.slane %v1239, 5
        %v1249 = vsel %vm941, %v1248, %v1247
        %v1250 = vrot.slane %v1240, 4
        %v1251 = vsel %vm944, %v1250, %v1249
        %v1252 = vrot.slane %v1241, 3
        %v1253 = vsel %vm947, %v1252, %v1251
        %v1254 = vrot.slane %v1242, 2
        %v1255 = vsel %vm950, %v1254, %v1253
        %v1256 = vrot.slane %v1243, 1
        %v1257 = vsel %vm953, %v1256, %v1255
        %v1258 = vpack.c.b16 %v1257, %v1257
        %1260 = vmatpush.bf16.msra.mxu0 %v840
        %1261 = vmatpush.bf16.msra.mxu0 %v839
        %1262 = vmatpush.bf16.msra.mxu0 %v838
        %1263 = vmatpush.bf16.msra.mxu0 %v837
        %1264 = vmatpush.bf16.msra.mxu0 %v836
        %1265 = vmatpush.bf16.msra.mxu0 %v835
        %1266 = vmatpush.bf16.msra.mxu0 %v834
        %1267 = vmatpush.bf16.msra.mxu0 %v833
        %1268 = vmatmul.bf16.gmra.mxu0 %v1258
        %v1269 = vpop.f32.mrf.mxu0
        %v1270 = vadd.f32 0.0, %v1269
        %v1271 = vpop.f32.mrf.mxu0
        %1272 = vdwg.mxu0
        %v1274 = vrot.slane %v1270, 1
        %v1275 = vrot.slane %v1270, 2
        %v1276 = vrot.slane %v1270, 3
        %v1277 = vrot.slane %v1270, 4
        %v1278 = vrot.slane %v1270, 5
        %v1279 = vrot.slane %v1270, 6
        %v1280 = vrot.slane %v1270, 7
        %v1289 = vadd.f32 %v1212, %v1270
        %v1290 = vadd.f32 %v1213, %v1274
        %v1291 = vadd.f32 %v1214, %v1275
        %v1292 = vadd.f32 %v1215, %v1276
        %v1293 = vadd.f32 %v1216, %v1277
        %v1294 = vadd.f32 %v1217, %v1278
        %v1295 = vadd.f32 %v1218, %v1279
        %v1296 = vadd.f32 %v1219, %v1280
        %v1297 = vtanh.pop %v1289
        %v1298 = vtanh.pop %v1290
        %v1299 = vtanh.pop %v1291
        %v1300 = vtanh.pop %v1292
        %v1301 = vtanh.pop %v1293
        %v1302 = vtanh.pop %v1294
        %v1303 = vtanh.pop %v1295
        %v1304 = vtanh.pop %v1296
        %1305 = vst [vmem:[#allocation3 + $0x4] sm:$0x1] %v1297
        %1306 = vst [vmem:[#allocation3 + $0x14] sm:$0x1] %v1298
        %1307 = vst [vmem:[#allocation3 + $0x24] sm:$0x1] %v1299
        %1308 = vst [vmem:[#allocation3 + $0x34] sm:$0x1] %v1300
        %1309 = vst [vmem:[#allocation3 + $0x44] sm:$0x1] %v1301
        %1310 = vst [vmem:[#allocation3 + $0x54] sm:$0x1] %v1302
        %1311 = vst [vmem:[#allocation3 + $0x64] sm:$0x1] %v1303
        %1312 = vst [vmem:[#allocation3 + $0x74] sm:$0x1] %v1304
        %v1313 = vld [vmem:[#allocation3 + $0x5] sm:$0x1]
        %v1314 = vld [vmem:[#allocation3 + $0x15] sm:$0x1]
        %v1315 = vld [vmem:[#allocation3 + $0x25] sm:$0x1]
        %v1316 = vld [vmem:[#allocation3 + $0x35] sm:$0x1]
        %v1317 = vld [vmem:[#allocation3 + $0x45] sm:$0x1]
        %v1318 = vld [vmem:[#allocation3 + $0x55] sm:$0x1]
        %v1319 = vld [vmem:[#allocation3 + $0x65] sm:$0x1]
        %v1320 = vld [vmem:[#allocation3 + $0x75] sm:$0x1]
        %v1321 = vpack.c.bf16 %v1297, %v1297
        %v1322 = vpack.c.bf16 %v1298, %v1298
        %v1323 = vpack.c.bf16 %v1299, %v1299
        %v1324 = vpack.c.bf16 %v1300, %v1300
        %v1325 = vpack.c.bf16 %v1301, %v1301
        %v1326 = vpack.c.bf16 %v1302, %v1302
        %v1327 = vpack.c.bf16 %v1303, %v1303
        %v1328 = vpack.c.bf16 %v1304, %v1304
        %v1337 = vunpack.c.l.b16 %v1321
        %v1338 = vunpack.c.l.b16 %v1322
        %v1339 = vunpack.c.l.b16 %v1323
        %v1340 = vunpack.c.l.b16 %v1324
        %v1341 = vunpack.c.l.b16 %v1325
        %v1342 = vunpack.c.l.b16 %v1326
        %v1343 = vunpack.c.l.b16 %v1327
        %v1344 = vunpack.c.l.b16 %v1328
        %v1345 = vrot.slane %v1338, 7
        %v1346 = vsel %vm935, %v1345, %v1337
        %v1347 = vrot.slane %v1339, 6
        %v1348 = vsel %vm938, %v1347, %v1346
        %v1349 = vrot.slane %v1340, 5
        %v1350 = vsel %vm941, %v1349, %v1348
        %v1351 = vrot.slane %v1341, 4
        %v1352 = vsel %vm944, %v1351, %v1350
        %v1353 = vrot.slane %v1342, 3
        %v1354 = vsel %vm947, %v1353, %v1352
        %v1355 = vrot.slane %v1343, 2
        %v1356 = vsel %vm950, %v1355, %v1354
        %v1357 = vrot.slane %v1344, 1
        %v1358 = vsel %vm953, %v1357, %v1356
        %v1359 = vpack.c.b16 %v1358, %v1358
        %1361 = vmatpush.bf16.msra.mxu0 %v840
        %1362 = vmatpush.bf16.msra.mxu0 %v839
        %1363 = vmatpush.bf16.msra.mxu0 %v838
        %1364 = vmatpush.bf16.msra.mxu0 %v837
        %1365 = vmatpush.bf16.msra.mxu0 %v836
        %1366 = vmatpush.bf16.msra.mxu0 %v835
        %1367 = vmatpush.bf16.msra.mxu0 %v834
        %1368 = vmatpush.bf16.msra.mxu0 %v833
        %1369 = vmatmul.bf16.gmra.mxu0 %v1359
        %v1370 = vpop.f32.mrf.mxu0
        %v1371 = vadd.f32 0.0, %v1370
        %v1372 = vpop.f32.mrf.mxu0
        %1373 = vdwg.mxu0
        %v1375 = vrot.slane %v1371, 1
        %v1376 = vrot.slane %v1371, 2
        %v1377 = vrot.slane %v1371, 3
        %v1378 = vrot.slane %v1371, 4
        %v1379 = vrot.slane %v1371, 5
        %v1380 = vrot.slane %v1371, 6
        %v1381 = vrot.slane %v1371, 7
        %v1390 = vadd.f32 %v1313, %v1371
        %v1391 = vadd.f32 %v1314, %v1375
        %v1392 = vadd.f32 %v1315, %v1376
        %v1393 = vadd.f32 %v1316, %v1377
        %v1394 = vadd.f32 %v1317, %v1378
        %v1395 = vadd.f32 %v1318, %v1379
        %v1396 = vadd.f32 %v1319, %v1380
        %v1397 = vadd.f32 %v1320, %v1381
        %v1398 = vtanh.pop %v1390
        %v1399 = vtanh.pop %v1391
        %v1400 = vtanh.pop %v1392
        %v1401 = vtanh.pop %v1393
        %v1402 = vtanh.pop %v1394
        %v1403 = vtanh.pop %v1395
        %v1404 = vtanh.pop %v1396
        %v1405 = vtanh.pop %v1397
        %1406 = vst [vmem:[#allocation3 + $0x5] sm:$0x1] %v1398
        %1407 = vst [vmem:[#allocation3 + $0x15] sm:$0x1] %v1399
        %1408 = vst [vmem:[#allocation3 + $0x25] sm:$0x1] %v1400
        %1409 = vst [vmem:[#allocation3 + $0x35] sm:$0x1] %v1401
        %1410 = vst [vmem:[#allocation3 + $0x45] sm:$0x1] %v1402
        %1411 = vst [vmem:[#allocation3 + $0x55] sm:$0x1] %v1403
        %1412 = vst [vmem:[#allocation3 + $0x65] sm:$0x1] %v1404
        %1413 = vst [vmem:[#allocation3 + $0x75] sm:$0x1] %v1405
        %v1414 = vld [vmem:[#allocation3 + $0x6] sm:$0x1]
        %v1415 = vld [vmem:[#allocation3 + $0x16] sm:$0x1]
        %v1416 = vld [vmem:[#allocation3 + $0x26] sm:$0x1]
        %v1417 = vld [vmem:[#allocation3 + $0x36] sm:$0x1]
        %v1418 = vld [vmem:[#allocation3 + $0x46] sm:$0x1]
        %v1419 = vld [vmem:[#allocation3 + $0x56] sm:$0x1]
        %v1420 = vld [vmem:[#allocation3 + $0x66] sm:$0x1]
        %v1421 = vld [vmem:[#allocation3 + $0x76] sm:$0x1]
        %v1422 = vpack.c.bf16 %v1398, %v1398
        %v1423 = vpack.c.bf16 %v1399, %v1399
        %v1424 = vpack.c.bf16 %v1400, %v1400
        %v1425 = vpack.c.bf16 %v1401, %v1401
        %v1426 = vpack.c.bf16 %v1402, %v1402
        %v1427 = vpack.c.bf16 %v1403, %v1403
        %v1428 = vpack.c.bf16 %v1404, %v1404
        %v1429 = vpack.c.bf16 %v1405, %v1405
        %v1438 = vunpack.c.l.b16 %v1422
        %v1439 = vunpack.c.l.b16 %v1423
        %v1440 = vunpack.c.l.b16 %v1424
        %v1441 = vunpack.c.l.b16 %v1425
        %v1442 = vunpack.c.l.b16 %v1426
        %v1443 = vunpack.c.l.b16 %v1427
        %v1444 = vunpack.c.l.b16 %v1428
        %v1445 = vunpack.c.l.b16 %v1429
        %v1446 = vrot.slane %v1439, 7
        %v1447 = vsel %vm935, %v1446, %v1438
        %v1448 = vrot.slane %v1440, 6
        %v1449 = vsel %vm938, %v1448, %v1447
        %v1450 = vrot.slane %v1441, 5
        %v1451 = vsel %vm941, %v1450, %v1449
        %v1452 = vrot.slane %v1442, 4
        %v1453 = vsel %vm944, %v1452, %v1451
        %v1454 = vrot.slane %v1443, 3
        %v1455 = vsel %vm947, %v1454, %v1453
        %v1456 = vrot.slane %v1444, 2
        %v1457 = vsel %vm950, %v1456, %v1455
        %v1458 = vrot.slane %v1445, 1
        %v1459 = vsel %vm953, %v1458, %v1457
        %v1460 = vpack.c.b16 %v1459, %v1459
        %1462 = vmatpush.bf16.msra.mxu0 %v840
        %1463 = vmatpush.bf16.msra.mxu0 %v839
        %1464 = vmatpush.bf16.msra.mxu0 %v838
        %1465 = vmatpush.bf16.msra.mxu0 %v837
        %1466 = vmatpush.bf16.msra.mxu0 %v836
        %1467 = vmatpush.bf16.msra.mxu0 %v835
        %1468 = vmatpush.bf16.msra.mxu0 %v834
        %1469 = vmatpush.bf16.msra.mxu0 %v833
        %1470 = vmatmul.bf16.gmra.mxu0 %v1460
        %v1471 = vpop.f32.mrf.mxu0
        %v1472 = vadd.f32 0.0, %v1471
        %v1473 = vpop.f32.mrf.mxu0
        %1474 = vdwg.mxu0
        %v1476 = vrot.slane %v1472, 1
        %v1477 = vrot.slane %v1472, 2
        %v1478 = vrot.slane %v1472, 3
        %v1479 = vrot.slane %v1472, 4
        %v1480 = vrot.slane %v1472, 5
        %v1481 = vrot.slane %v1472, 6
        %v1482 = vrot.slane %v1472, 7
        %v1491 = vadd.f32 %v1414, %v1472
        %v1492 = vadd.f32 %v1415, %v1476
        %v1493 = vadd.f32 %v1416, %v1477
        %v1494 = vadd.f32 %v1417, %v1478
        %v1495 = vadd.f32 %v1418, %v1479
        %v1496 = vadd.f32 %v1419, %v1480
        %v1497 = vadd.f32 %v1420, %v1481
        %v1498 = vadd.f32 %v1421, %v1482
        %v1499 = vtanh.pop %v1491
        %v1500 = vtanh.pop %v1492
        %v1501 = vtanh.pop %v1493
        %v1502 = vtanh.pop %v1494
        %v1503 = vtanh.pop %v1495
        %v1504 = vtanh.pop %v1496
        %v1505 = vtanh.pop %v1497
        %v1506 = vtanh.pop %v1498
        %1507 = vst [vmem:[#allocation3 + $0x6] sm:$0x1] %v1499
        %1508 = vst [vmem:[#allocation3 + $0x16] sm:$0x1] %v1500
        %1509 = vst [vmem:[#allocation3 + $0x26] sm:$0x1] %v1501
        %1510 = vst [vmem:[#allocation3 + $0x36] sm:$0x1] %v1502
        %1511 = vst [vmem:[#allocation3 + $0x46] sm:$0x1] %v1503
        %1512 = vst [vmem:[#allocation3 + $0x56] sm:$0x1] %v1504
        %1513 = vst [vmem:[#allocation3 + $0x66] sm:$0x1] %v1505
        %1514 = vst [vmem:[#allocation3 + $0x76] sm:$0x1] %v1506
        %v1515 = vld [vmem:[#allocation3 + $0x7] sm:$0x1]
        %v1516 = vld [vmem:[#allocation3 + $0x17] sm:$0x1]
        %v1517 = vld [vmem:[#allocation3 + $0x27] sm:$0x1]
        %v1518 = vld [vmem:[#allocation3 + $0x37] sm:$0x1]
        %v1519 = vld [vmem:[#allocation3 + $0x47] sm:$0x1]
        %v1520 = vld [vmem:[#allocation3 + $0x57] sm:$0x1]
        %v1521 = vld [vmem:[#allocation3 + $0x67] sm:$0x1]
        %v1522 = vld [vmem:[#allocation3 + $0x77] sm:$0x1]
        %v1523 = vpack.c.bf16 %v1499, %v1499
        %v1524 = vpack.c.bf16 %v1500, %v1500
        %v1525 = vpack.c.bf16 %v1501, %v1501
        %v1526 = vpack.c.bf16 %v1502, %v1502
        %v1527 = vpack.c.bf16 %v1503, %v1503
        %v1528 = vpack.c.bf16 %v1504, %v1504
        %v1529 = vpack.c.bf16 %v1505, %v1505
        %v1530 = vpack.c.bf16 %v1506, %v1506
        %v1539 = vunpack.c.l.b16 %v1523
        %v1540 = vunpack.c.l.b16 %v1524
        %v1541 = vunpack.c.l.b16 %v1525
        %v1542 = vunpack.c.l.b16 %v1526
        %v1543 = vunpack.c.l.b16 %v1527
        %v1544 = vunpack.c.l.b16 %v1528
        %v1545 = vunpack.c.l.b16 %v1529
        %v1546 = vunpack.c.l.b16 %v1530
        %v1547 = vrot.slane %v1540, 7
        %v1548 = vsel %vm935, %v1547, %v1539
        %v1549 = vrot.slane %v1541, 6
        %v1550 = vsel %vm938, %v1549, %v1548
        %v1551 = vrot.slane %v1542, 5
        %v1552 = vsel %vm941, %v1551, %v1550
        %v1553 = vrot.slane %v1543, 4
        %v1554 = vsel %vm944, %v1553, %v1552
        %v1555 = vrot.slane %v1544, 3
        %v1556 = vsel %vm947, %v1555, %v1554
        %v1557 = vrot.slane %v1545, 2
        %v1558 = vsel %vm950, %v1557, %v1556
        %v1559 = vrot.slane %v1546, 1
        %v1560 = vsel %vm953, %v1559, %v1558
        %v1561 = vpack.c.b16 %v1560, %v1560
        %1563 = vmatpush.bf16.msra.mxu0 %v840
        %1564 = vmatpush.bf16.msra.mxu0 %v839
        %1565 = vmatpush.bf16.msra.mxu0 %v838
        %1566 = vmatpush.bf16.msra.mxu0 %v837
        %1567 = vmatpush.bf16.msra.mxu0 %v836
        %1568 = vmatpush.bf16.msra.mxu0 %v835
        %1569 = vmatpush.bf16.msra.mxu0 %v834
        %1570 = vmatpush.bf16.msra.mxu0 %v833
        %1571 = vmatmul.bf16.gmra.mxu0 %v1561
        %v1572 = vpop.f32.mrf.mxu0
        %v1573 = vadd.f32 0.0, %v1572
        %v1574 = vpop.f32.mrf.mxu0
        %1575 = vdwg.mxu0
        %v1577 = vrot.slane %v1573, 1
        %v1578 = vrot.slane %v1573, 2
        %v1579 = vrot.slane %v1573, 3
        %v1580 = vrot.slane %v1573, 4
        %v1581 = vrot.slane %v1573, 5
        %v1582 = vrot.slane %v1573, 6
        %v1583 = vrot.slane %v1573, 7
        %v1592 = vadd.f32 %v1515, %v1573
        %v1593 = vadd.f32 %v1516, %v1577
        %v1594 = vadd.f32 %v1517, %v1578
        %v1595 = vadd.f32 %v1518, %v1579
        %v1596 = vadd.f32 %v1519, %v1580
        %v1597 = vadd.f32 %v1520, %v1581
        %v1598 = vadd.f32 %v1521, %v1582
        %v1599 = vadd.f32 %v1522, %v1583
        %v1600 = vtanh.pop %v1592
        %v1601 = vtanh.pop %v1593
        %v1602 = vtanh.pop %v1594
        %v1603 = vtanh.pop %v1595
        %v1604 = vtanh.pop %v1596
        %v1605 = vtanh.pop %v1597
        %v1606 = vtanh.pop %v1598
        %v1607 = vtanh.pop %v1599
        %1608 = vst [vmem:[#allocation3 + $0x7] sm:$0x1] %v1600
        %1609 = vst [vmem:[#allocation3 + $0x17] sm:$0x1] %v1601
        %1610 = vst [vmem:[#allocation3 + $0x27] sm:$0x1] %v1602
        %1611 = vst [vmem:[#allocation3 + $0x37] sm:$0x1] %v1603
        %1612 = vst [vmem:[#allocation3 + $0x47] sm:$0x1] %v1604
        %1613 = vst [vmem:[#allocation3 + $0x57] sm:$0x1] %v1605
        %1614 = vst [vmem:[#allocation3 + $0x67] sm:$0x1] %v1606
        %1615 = vst [vmem:[#allocation3 + $0x77] sm:$0x1] %v1607
        %v1616 = vld [vmem:[#allocation3 + $0x8] sm:$0x1]
        %v1617 = vld [vmem:[#allocation3 + $0x18] sm:$0x1]
        %v1618 = vld [vmem:[#allocation3 + $0x28] sm:$0x1]
        %v1619 = vld [vmem:[#allocation3 + $0x38] sm:$0x1]
        %v1620 = vld [vmem:[#allocation3 + $0x48] sm:$0x1]
        %v1621 = vld [vmem:[#allocation3 + $0x58] sm:$0x1]
        %v1622 = vld [vmem:[#allocation3 + $0x68] sm:$0x1]
        %v1623 = vld [vmem:[#allocation3 + $0x78] sm:$0x1]
        %v1624 = vpack.c.bf16 %v1600, %v1600
        %v1625 = vpack.c.bf16 %v1601, %v1601
        %v1626 = vpack.c.bf16 %v1602, %v1602
        %v1627 = vpack.c.bf16 %v1603, %v1603
        %v1628 = vpack.c.bf16 %v1604, %v1604
        %v1629 = vpack.c.bf16 %v1605, %v1605
        %v1630 = vpack.c.bf16 %v1606, %v1606
        %v1631 = vpack.c.bf16 %v1607, %v1607
        %v1640 = vunpack.c.l.b16 %v1624
        %v1641 = vunpack.c.l.b16 %v1625
        %v1642 = vunpack.c.l.b16 %v1626
        %v1643 = vunpack.c.l.b16 %v1627
        %v1644 = vunpack.c.l.b16 %v1628
        %v1645 = vunpack.c.l.b16 %v1629
        %v1646 = vunpack.c.l.b16 %v1630
        %v1647 = vunpack.c.l.b16 %v1631
        %v1648 = vrot.slane %v1641, 7
        %v1649 = vsel %vm935, %v1648, %v1640
        %v1650 = vrot.slane %v1642, 6
        %v1651 = vsel %vm938, %v1650, %v1649
        %v1652 = vrot.slane %v1643, 5
        %v1653 = vsel %vm941, %v1652, %v1651
        %v1654 = vrot.slane %v1644, 4
        %v1655 = vsel %vm944, %v1654, %v1653
        %v1656 = vrot.slane %v1645, 3
        %v1657 = vsel %vm947, %v1656, %v1655
        %v1658 = vrot.slane %v1646, 2
        %v1659 = vsel %vm950, %v1658, %v1657
        %v1660 = vrot.slane %v1647, 1
        %v1661 = vsel %vm953, %v1660, %v1659
        %v1662 = vpack.c.b16 %v1661, %v1661
        %1664 = vmatpush.bf16.msra.mxu0 %v840
        %1665 = vmatpush.bf16.msra.mxu0 %v839
        %1666 = vmatpush.bf16.msra.mxu0 %v838
        %1667 = vmatpush.bf16.msra.mxu0 %v837
        %1668 = vmatpush.bf16.msra.mxu0 %v836
        %1669 = vmatpush.bf16.msra.mxu0 %v835
        %1670 = vmatpush.bf16.msra.mxu0 %v834
        %1671 = vmatpush.bf16.msra.mxu0 %v833
        %1672 = vmatmul.bf16.gmra.mxu0 %v1662
        %v1673 = vpop.f32.mrf.mxu0
        %v1674 = vadd.f32 0.0, %v1673
        %v1675 = vpop.f32.mrf.mxu0
        %1676 = vdwg.mxu0
        %v1678 = vrot.slane %v1674, 1
        %v1679 = vrot.slane %v1674, 2
        %v1680 = vrot.slane %v1674, 3
        %v1681 = vrot.slane %v1674, 4
        %v1682 = vrot.slane %v1674, 5
        %v1683 = vrot.slane %v1674, 6
        %v1684 = vrot.slane %v1674, 7
        %v1693 = vadd.f32 %v1616, %v1674
        %v1694 = vadd.f32 %v1617, %v1678
        %v1695 = vadd.f32 %v1618, %v1679
        %v1696 = vadd.f32 %v1619, %v1680
        %v1697 = vadd.f32 %v1620, %v1681
        %v1698 = vadd.f32 %v1621, %v1682
        %v1699 = vadd.f32 %v1622, %v1683
        %v1700 = vadd.f32 %v1623, %v1684
        %v1701 = vtanh.pop %v1693
        %v1702 = vtanh.pop %v1694
        %v1703 = vtanh.pop %v1695
        %v1704 = vtanh.pop %v1696
        %v1705 = vtanh.pop %v1697
        %v1706 = vtanh.pop %v1698
        %v1707 = vtanh.pop %v1699
        %v1708 = vtanh.pop %v1700
        %1709 = vst [vmem:[#allocation3 + $0x8] sm:$0x1] %v1701
        %1710 = vst [vmem:[#allocation3 + $0x18] sm:$0x1] %v1702
        %1711 = vst [vmem:[#allocation3 + $0x28] sm:$0x1] %v1703
        %1712 = vst [vmem:[#allocation3 + $0x38] sm:$0x1] %v1704
        %1713 = vst [vmem:[#allocation3 + $0x48] sm:$0x1] %v1705
        %1714 = vst [vmem:[#allocation3 + $0x58] sm:$0x1] %v1706
        %1715 = vst [vmem:[#allocation3 + $0x68] sm:$0x1] %v1707
        %1716 = vst [vmem:[#allocation3 + $0x78] sm:$0x1] %v1708
        %v1717 = vld [vmem:[#allocation3 + $0x9] sm:$0x1]
        %v1718 = vld [vmem:[#allocation3 + $0x19] sm:$0x1]
        %v1719 = vld [vmem:[#allocation3 + $0x29] sm:$0x1]
        %v1720 = vld [vmem:[#allocation3 + $0x39] sm:$0x1]
        %v1721 = vld [vmem:[#allocation3 + $0x49] sm:$0x1]
        %v1722 = vld [vmem:[#allocation3 + $0x59] sm:$0x1]
        %v1723 = vld [vmem:[#allocation3 + $0x69] sm:$0x1]
        %v1724 = vld [vmem:[#allocation3 + $0x79] sm:$0x1]
        %v1725 = vpack.c.bf16 %v1701, %v1701
        %v1726 = vpack.c.bf16 %v1702, %v1702
        %v1727 = vpack.c.bf16 %v1703, %v1703
        %v1728 = vpack.c.bf16 %v1704, %v1704
        %v1729 = vpack.c.bf16 %v1705, %v1705
        %v1730 = vpack.c.bf16 %v1706, %v1706
        %v1731 = vpack.c.bf16 %v1707, %v1707
        %v1732 = vpack.c.bf16 %v1708, %v1708
        %v1741 = vunpack.c.l.b16 %v1725
        %v1742 = vunpack.c.l.b16 %v1726
        %v1743 = vunpack.c.l.b16 %v1727
        %v1744 = vunpack.c.l.b16 %v1728
        %v1745 = vunpack.c.l.b16 %v1729
        %v1746 = vunpack.c.l.b16 %v1730
        %v1747 = vunpack.c.l.b16 %v1731
        %v1748 = vunpack.c.l.b16 %v1732
        %v1749 = vrot.slane %v1742, 7
        %v1750 = vsel %vm935, %v1749, %v1741
        %v1751 = vrot.slane %v1743, 6
        %v1752 = vsel %vm938, %v1751, %v1750
        %v1753 = vrot.slane %v1744, 5
        %v1754 = vsel %vm941, %v1753, %v1752
        %v1755 = vrot.slane %v1745, 4
        %v1756 = vsel %vm944, %v1755, %v1754
        %v1757 = vrot.slane %v1746, 3
        %v1758 = vsel %vm947, %v1757, %v1756
        %v1759 = vrot.slane %v1747, 2
        %v1760 = vsel %vm950, %v1759, %v1758
        %v1761 = vrot.slane %v1748, 1
        %v1762 = vsel %vm953, %v1761, %v1760
        %v1763 = vpack.c.b16 %v1762, %v1762
        %1765 = vmatpush.bf16.msra.mxu0 %v840
        %1766 = vmatpush.bf16.msra.mxu0 %v839
        %1767 = vmatpush.bf16.msra.mxu0 %v838
        %1768 = vmatpush.bf16.msra.mxu0 %v837
        %1769 = vmatpush.bf16.msra.mxu0 %v836
        %1770 = vmatpush.bf16.msra.mxu0 %v835
        %1771 = vmatpush.bf16.msra.mxu0 %v834
        %1772 = vmatpush.bf16.msra.mxu0 %v833
        %1773 = vmatmul.bf16.gmra.mxu0 %v1763
        %v1774 = vpop.f32.mrf.mxu0
        %v1775 = vadd.f32 0.0, %v1774
        %v1776 = vpop.f32.mrf.mxu0
        %1777 = vdwg.mxu0
        %v1779 = vrot.slane %v1775, 1
        %v1780 = vrot.slane %v1775, 2
        %v1781 = vrot.slane %v1775, 3
        %v1782 = vrot.slane %v1775, 4
        %v1783 = vrot.slane %v1775, 5
        %v1784 = vrot.slane %v1775, 6
        %v1785 = vrot.slane %v1775, 7
        %v1794 = vadd.f32 %v1717, %v1775
        %v1795 = vadd.f32 %v1718, %v1779
        %v1796 = vadd.f32 %v1719, %v1780
        %v1797 = vadd.f32 %v1720, %v1781
        %v1798 = vadd.f32 %v1721, %v1782
        %v1799 = vadd.f32 %v1722, %v1783
        %v1800 = vadd.f32 %v1723, %v1784
        %v1801 = vadd.f32 %v1724, %v1785
        %v1802 = vtanh.pop %v1794
        %v1803 = vtanh.pop %v1795
        %v1804 = vtanh.pop %v1796
        %v1805 = vtanh.pop %v1797
        %v1806 = vtanh.pop %v1798
        %v1807 = vtanh.pop %v1799
        %v1808 = vtanh.pop %v1800
        %v1809 = vtanh.pop %v1801
        %1810 = vst [vmem:[#allocation3 + $0x9] sm:$0x1] %v1802
        %1811 = vst [vmem:[#allocation3 + $0x19] sm:$0x1] %v1803
        %1812 = vst [vmem:[#allocation3 + $0x29] sm:$0x1] %v1804
        %1813 = vst [vmem:[#allocation3 + $0x39] sm:$0x1] %v1805
        %1814 = vst [vmem:[#allocation3 + $0x49] sm:$0x1] %v1806
        %1815 = vst [vmem:[#allocation3 + $0x59] sm:$0x1] %v1807
        %1816 = vst [vmem:[#allocation3 + $0x69] sm:$0x1] %v1808
        %1817 = vst [vmem:[#allocation3 + $0x79] sm:$0x1] %v1809
        %v1818 = vld [vmem:[#allocation3 + $0xa] sm:$0x1]
        %v1819 = vld [vmem:[#allocation3 + $0x1a] sm:$0x1]
        %v1820 = vld [vmem:[#allocation3 + $0x2a] sm:$0x1]
        %v1821 = vld [vmem:[#allocation3 + $0x3a] sm:$0x1]
        %v1822 = vld [vmem:[#allocation3 + $0x4a] sm:$0x1]
        %v1823 = vld [vmem:[#allocation3 + $0x5a] sm:$0x1]
        %v1824 = vld [vmem:[#allocation3 + $0x6a] sm:$0x1]
        %v1825 = vld [vmem:[#allocation3 + $0x7a] sm:$0x1]
        %v1826 = vpack.c.bf16 %v1802, %v1802
        %v1827 = vpack.c.bf16 %v1803, %v1803
        %v1828 = vpack.c.bf16 %v1804, %v1804
        %v1829 = vpack.c.bf16 %v1805, %v1805
        %v1830 = vpack.c.bf16 %v1806, %v1806
        %v1831 = vpack.c.bf16 %v1807, %v1807
        %v1832 = vpack.c.bf16 %v1808, %v1808
        %v1833 = vpack.c.bf16 %v1809, %v1809
        %v1842 = vunpack.c.l.b16 %v1826
        %v1843 = vunpack.c.l.b16 %v1827
        %v1844 = vunpack.c.l.b16 %v1828
        %v1845 = vunpack.c.l.b16 %v1829
        %v1846 = vunpack.c.l.b16 %v1830
        %v1847 = vunpack.c.l.b16 %v1831
        %v1848 = vunpack.c.l.b16 %v1832
        %v1849 = vunpack.c.l.b16 %v1833
        %v1850 = vrot.slane %v1843, 7
        %v1851 = vsel %vm935, %v1850, %v1842
        %v1852 = vrot.slane %v1844, 6
        %v1853 = vsel %vm938, %v1852, %v1851
        %v1854 = vrot.slane %v1845, 5
        %v1855 = vsel %vm941, %v1854, %v1853
        %v1856 = vrot.slane %v1846, 4
        %v1857 = vsel %vm944, %v1856, %v1855
        %v1858 = vrot.slane %v1847, 3
        %v1859 = vsel %vm947, %v1858, %v1857
        %v1860 = vrot.slane %v1848, 2
        %v1861 = vsel %vm950, %v1860, %v1859
        %v1862 = vrot.slane %v1849, 1
        %v1863 = vsel %vm953, %v1862, %v1861
        %v1864 = vpack.c.b16 %v1863, %v1863
        %1866 = vmatpush.bf16.msra.mxu0 %v840
        %1867 = vmatpush.bf16.msra.mxu0 %v839
        %1868 = vmatpush.bf16.msra.mxu0 %v838
        %1869 = vmatpush.bf16.msra.mxu0 %v837
        %1870 = vmatpush.bf16.msra.mxu0 %v836
        %1871 = vmatpush.bf16.msra.mxu0 %v835
        %1872 = vmatpush.bf16.msra.mxu0 %v834
        %1873 = vmatpush.bf16.msra.mxu0 %v833
        %1874 = vmatmul.bf16.gmra.mxu0 %v1864
        %v1875 = vpop.f32.mrf.mxu0
        %v1876 = vadd.f32 0.0, %v1875
        %v1877 = vpop.f32.mrf.mxu0
        %1878 = vdwg.mxu0
        %v1880 = vrot.slane %v1876, 1
        %v1881 = vrot.slane %v1876, 2
        %v1882 = vrot.slane %v1876, 3
        %v1883 = vrot.slane %v1876, 4
        %v1884 = vrot.slane %v1876, 5
        %v1885 = vrot.slane %v1876, 6
        %v1886 = vrot.slane %v1876, 7
        %v1895 = vadd.f32 %v1818, %v1876
        %v1896 = vadd.f32 %v1819, %v1880
        %v1897 = vadd.f32 %v1820, %v1881
        %v1898 = vadd.f32 %v1821, %v1882
        %v1899 = vadd.f32 %v1822, %v1883
        %v1900 = vadd.f32 %v1823, %v1884
        %v1901 = vadd.f32 %v1824, %v1885
        %v1902 = vadd.f32 %v1825, %v1886
        %v1903 = vtanh.pop %v1895
        %v1904 = vtanh.pop %v1896
        %v1905 = vtanh.pop %v1897
        %v1906 = vtanh.pop %v1898
        %v1907 = vtanh.pop %v1899
        %v1908 = vtanh.pop %v1900
        %v1909 = vtanh.pop %v1901
        %v1910 = vtanh.pop %v1902
        %1911 = vst [vmem:[#allocation3 + $0xa] sm:$0x1] %v1903
        %1912 = vst [vmem:[#allocation3 + $0x1a] sm:$0x1] %v1904
        %1913 = vst [vmem:[#allocation3 + $0x2a] sm:$0x1] %v1905
        %1914 = vst [vmem:[#allocation3 + $0x3a] sm:$0x1] %v1906
        %1915 = vst [vmem:[#allocation3 + $0x4a] sm:$0x1] %v1907
        %1916 = vst [vmem:[#allocation3 + $0x5a] sm:$0x1] %v1908
        %1917 = vst [vmem:[#allocation3 + $0x6a] sm:$0x1] %v1909
        %1918 = vst [vmem:[#allocation3 + $0x7a] sm:$0x1] %v1910
        %v1919 = vld [vmem:[#allocation3 + $0xb] sm:$0x1]
        %v1920 = vld [vmem:[#allocation3 + $0x1b] sm:$0x1]
        %v1921 = vld [vmem:[#allocation3 + $0x2b] sm:$0x1]
        %v1922 = vld [vmem:[#allocation3 + $0x3b] sm:$0x1]
        %v1923 = vld [vmem:[#allocation3 + $0x4b] sm:$0x1]
        %v1924 = vld [vmem:[#allocation3 + $0x5b] sm:$0x1]
        %v1925 = vld [vmem:[#allocation3 + $0x6b] sm:$0x1]
        %v1926 = vld [vmem:[#allocation3 + $0x7b] sm:$0x1]
        %v1927 = vpack.c.bf16 %v1903, %v1903
        %v1928 = vpack.c.bf16 %v1904, %v1904
        %v1929 = vpack.c.bf16 %v1905, %v1905
        %v1930 = vpack.c.bf16 %v1906, %v1906
        %v1931 = vpack.c.bf16 %v1907, %v1907
        %v1932 = vpack.c.bf16 %v1908, %v1908
        %v1933 = vpack.c.bf16 %v1909, %v1909
        %v1934 = vpack.c.bf16 %v1910, %v1910
        %v1943 = vunpack.c.l.b16 %v1927
        %v1944 = vunpack.c.l.b16 %v1928
        %v1945 = vunpack.c.l.b16 %v1929
        %v1946 = vunpack.c.l.b16 %v1930
        %v1947 = vunpack.c.l.b16 %v1931
        %v1948 = vunpack.c.l.b16 %v1932
        %v1949 = vunpack.c.l.b16 %v1933
        %v1950 = vunpack.c.l.b16 %v1934
        %v1951 = vrot.slane %v1944, 7
        %v1952 = vsel %vm935, %v1951, %v1943
        %v1953 = vrot.slane %v1945, 6
        %v1954 = vsel %vm938, %v1953, %v1952
        %v1955 = vrot.slane %v1946, 5
        %v1956 = vsel %vm941, %v1955, %v1954
        %v1957 = vrot.slane %v1947, 4
        %v1958 = vsel %vm944, %v1957, %v1956
        %v1959 = vrot.slane %v1948, 3
        %v1960 = vsel %vm947, %v1959, %v1958
        %v1961 = vrot.slane %v1949, 2
        %v1962 = vsel %vm950, %v1961, %v1960
        %v1963 = vrot.slane %v1950, 1
        %v1964 = vsel %vm953, %v1963, %v1962
        %v1965 = vpack.c.b16 %v1964, %v1964
        %1967 = vmatpush.bf16.msra.mxu0 %v840
        %1968 = vmatpush.bf16.msra.mxu0 %v839
        %1969 = vmatpush.bf16.msra.mxu0 %v838
        %1970 = vmatpush.bf16.msra.mxu0 %v837
        %1971 = vmatpush.bf16.msra.mxu0 %v836
        %1972 = vmatpush.bf16.msra.mxu0 %v835
        %1973 = vmatpush.bf16.msra.mxu0 %v834
        %1974 = vmatpush.bf16.msra.mxu0 %v833
        %1975 = vmatmul.bf16.gmra.mxu0 %v1965
        %v1976 = vpop.f32.mrf.mxu0
        %v1977 = vadd.f32 0.0, %v1976
        %v1978 = vpop.f32.mrf.mxu0
        %1979 = vdwg.mxu0
        %v1981 = vrot.slane %v1977, 1
        %v1982 = vrot.slane %v1977, 2
        %v1983 = vrot.slane %v1977, 3
        %v1984 = vrot.slane %v1977, 4
        %v1985 = vrot.slane %v1977, 5
        %v1986 = vrot.slane %v1977, 6
        %v1987 = vrot.slane %v1977, 7
        %v1996 = vadd.f32 %v1919, %v1977
        %v1997 = vadd.f32 %v1920, %v1981
        %v1998 = vadd.f32 %v1921, %v1982
        %v1999 = vadd.f32 %v1922, %v1983
        %v2000 = vadd.f32 %v1923, %v1984
        %v2001 = vadd.f32 %v1924, %v1985
        %v2002 = vadd.f32 %v1925, %v1986
        %v2003 = vadd.f32 %v1926, %v1987
        %v2004 = vtanh.pop %v1996
        %v2005 = vtanh.pop %v1997
        %v2006 = vtanh.pop %v1998
        %v2007 = vtanh.pop %v1999
        %v2008 = vtanh.pop %v2000
        %v2009 = vtanh.pop %v2001
        %v2010 = vtanh.pop %v2002
        %v2011 = vtanh.pop %v2003
        %2012 = vst [vmem:[#allocation3 + $0xb] sm:$0x1] %v2004
        %2013 = vst [vmem:[#allocation3 + $0x1b] sm:$0x1] %v2005
        %2014 = vst [vmem:[#allocation3 + $0x2b] sm:$0x1] %v2006
        %2015 = vst [vmem:[#allocation3 + $0x3b] sm:$0x1] %v2007
        %2016 = vst [vmem:[#allocation3 + $0x4b] sm:$0x1] %v2008
        %2017 = vst [vmem:[#allocation3 + $0x5b] sm:$0x1] %v2009
        %2018 = vst [vmem:[#allocation3 + $0x6b] sm:$0x1] %v2010
        %2019 = vst [vmem:[#allocation3 + $0x7b] sm:$0x1] %v2011
        %v2020 = vld [vmem:[#allocation3 + $0xc] sm:$0x1]
        %v2021 = vld [vmem:[#allocation3 + $0x1c] sm:$0x1]
        %v2022 = vld [vmem:[#allocation3 + $0x2c] sm:$0x1]
        %v2023 = vld [vmem:[#allocation3 + $0x3c] sm:$0x1]
        %v2024 = vld [vmem:[#allocation3 + $0x4c] sm:$0x1]
        %v2025 = vld [vmem:[#allocation3 + $0x5c] sm:$0x1]
        %v2026 = vld [vmem:[#allocation3 + $0x6c] sm:$0x1]
        %v2027 = vld [vmem:[#allocation3 + $0x7c] sm:$0x1]
        %v2028 = vpack.c.bf16 %v2004, %v2004
        %v2029 = vpack.c.bf16 %v2005, %v2005
        %v2030 = vpack.c.bf16 %v2006, %v2006
        %v2031 = vpack.c.bf16 %v2007, %v2007
        %v2032 = vpack.c.bf16 %v2008, %v2008
        %v2033 = vpack.c.bf16 %v2009, %v2009
        %v2034 = vpack.c.bf16 %v2010, %v2010
        %v2035 = vpack.c.bf16 %v2011, %v2011
        %v2044 = vunpack.c.l.b16 %v2028
        %v2045 = vunpack.c.l.b16 %v2029
        %v2046 = vunpack.c.l.b16 %v2030
        %v2047 = vunpack.c.l.b16 %v2031
        %v2048 = vunpack.c.l.b16 %v2032
        %v2049 = vunpack.c.l.b16 %v2033
        %v2050 = vunpack.c.l.b16 %v2034
        %v2051 = vunpack.c.l.b16 %v2035
        %v2052 = vrot.slane %v2045, 7
        %v2053 = vsel %vm935, %v2052, %v2044
        %v2054 = vrot.slane %v2046, 6
        %v2055 = vsel %vm938, %v2054, %v2053
        %v2056 = vrot.slane %v2047, 5
        %v2057 = vsel %vm941, %v2056, %v2055
        %v2058 = vrot.slane %v2048, 4
        %v2059 = vsel %vm944, %v2058, %v2057
        %v2060 = vrot.slane %v2049, 3
        %v2061 = vsel %vm947, %v2060, %v2059
        %v2062 = vrot.slane %v2050, 2
        %v2063 = vsel %vm950, %v2062, %v2061
        %v2064 = vrot.slane %v2051, 1
        %v2065 = vsel %vm953, %v2064, %v2063
        %v2066 = vpack.c.b16 %v2065, %v2065
        %2068 = vmatpush.bf16.msra.mxu0 %v840
        %2069 = vmatpush.bf16.msra.mxu0 %v839
        %2070 = vmatpush.bf16.msra.mxu0 %v838
        %2071 = vmatpush.bf16.msra.mxu0 %v837
        %2072 = vmatpush.bf16.msra.mxu0 %v836
        %2073 = vmatpush.bf16.msra.mxu0 %v835
        %2074 = vmatpush.bf16.msra.mxu0 %v834
        %2075 = vmatpush.bf16.msra.mxu0 %v833
        %2076 = vmatmul.bf16.gmra.mxu0 %v2066
        %v2077 = vpop.f32.mrf.mxu0
        %v2078 = vadd.f32 0.0, %v2077
        %v2079 = vpop.f32.mrf.mxu0
        %2080 = vdwg.mxu0
        %v2082 = vrot.slane %v2078, 1
        %v2083 = vrot.slane %v2078, 2
        %v2084 = vrot.slane %v2078, 3
        %v2085 = vrot.slane %v2078, 4
        %v2086 = vrot.slane %v2078, 5
        %v2087 = vrot.slane %v2078, 6
        %v2088 = vrot.slane %v2078, 7
        %v2097 = vadd.f32 %v2020, %v2078
        %v2098 = vadd.f32 %v2021, %v2082
        %v2099 = vadd.f32 %v2022, %v2083
        %v2100 = vadd.f32 %v2023, %v2084
        %v2101 = vadd.f32 %v2024, %v2085
        %v2102 = vadd.f32 %v2025, %v2086
        %v2103 = vadd.f32 %v2026, %v2087
        %v2104 = vadd.f32 %v2027, %v2088
        %v2105 = vtanh.pop %v2097
        %v2106 = vtanh.pop %v2098
        %v2107 = vtanh.pop %v2099
        %v2108 = vtanh.pop %v2100
        %v2109 = vtanh.pop %v2101
        %v2110 = vtanh.pop %v2102
        %v2111 = vtanh.pop %v2103
        %v2112 = vtanh.pop %v2104
        %2113 = vst [vmem:[#allocation3 + $0xc] sm:$0x1] %v2105
        %2114 = vst [vmem:[#allocation3 + $0x1c] sm:$0x1] %v2106
        %2115 = vst [vmem:[#allocation3 + $0x2c] sm:$0x1] %v2107
        %2116 = vst [vmem:[#allocation3 + $0x3c] sm:$0x1] %v2108
        %2117 = vst [vmem:[#allocation3 + $0x4c] sm:$0x1] %v2109
        %2118 = vst [vmem:[#allocation3 + $0x5c] sm:$0x1] %v2110
        %2119 = vst [vmem:[#allocation3 + $0x6c] sm:$0x1] %v2111
        %2120 = vst [vmem:[#allocation3 + $0x7c] sm:$0x1] %v2112
        %v2121 = vld [vmem:[#allocation3 + $0xd] sm:$0x1]
        %v2122 = vld [vmem:[#allocation3 + $0x1d] sm:$0x1]
        %v2123 = vld [vmem:[#allocation3 + $0x2d] sm:$0x1]
        %v2124 = vld [vmem:[#allocation3 + $0x3d] sm:$0x1]
        %v2125 = vld [vmem:[#allocation3 + $0x4d] sm:$0x1]
        %v2126 = vld [vmem:[#allocation3 + $0x5d] sm:$0x1]
        %v2127 = vld [vmem:[#allocation3 + $0x6d] sm:$0x1]
        %v2128 = vld [vmem:[#allocation3 + $0x7d] sm:$0x1]
        %v2129 = vpack.c.bf16 %v2105, %v2105
        %v2130 = vpack.c.bf16 %v2106, %v2106
        %v2131 = vpack.c.bf16 %v2107, %v2107
        %v2132 = vpack.c.bf16 %v2108, %v2108
        %v2133 = vpack.c.bf16 %v2109, %v2109
        %v2134 = vpack.c.bf16 %v2110, %v2110
        %v2135 = vpack.c.bf16 %v2111, %v2111
        %v2136 = vpack.c.bf16 %v2112, %v2112
        %v2145 = vunpack.c.l.b16 %v2129
        %v2146 = vunpack.c.l.b16 %v2130
        %v2147 = vunpack.c.l.b16 %v2131
        %v2148 = vunpack.c.l.b16 %v2132
        %v2149 = vunpack.c.l.b16 %v2133
        %v2150 = vunpack.c.l.b16 %v2134
        %v2151 = vunpack.c.l.b16 %v2135
        %v2152 = vunpack.c.l.b16 %v2136
        %v2153 = vrot.slane %v2146, 7
        %v2154 = vsel %vm935, %v2153, %v2145
        %v2155 = vrot.slane %v2147, 6
        %v2156 = vsel %vm938, %v2155, %v2154
        %v2157 = vrot.slane %v2148, 5
        %v2158 = vsel %vm941, %v2157, %v2156
        %v2159 = vrot.slane %v2149, 4
        %v2160 = vsel %vm944, %v2159, %v2158
        %v2161 = vrot.slane %v2150, 3
        %v2162 = vsel %vm947, %v2161, %v2160
        %v2163 = vrot.slane %v2151, 2
        %v2164 = vsel %vm950, %v2163, %v2162
        %v2165 = vrot.slane %v2152, 1
        %v2166 = vsel %vm953, %v2165, %v2164
        %v2167 = vpack.c.b16 %v2166, %v2166
        %2169 = vmatpush.bf16.msra.mxu0 %v840
        %2170 = vmatpush.bf16.msra.mxu0 %v839
        %2171 = vmatpush.bf16.msra.mxu0 %v838
        %2172 = vmatpush.bf16.msra.mxu0 %v837
        %2173 = vmatpush.bf16.msra.mxu0 %v836
        %2174 = vmatpush.bf16.msra.mxu0 %v835
        %2175 = vmatpush.bf16.msra.mxu0 %v834
        %2176 = vmatpush.bf16.msra.mxu0 %v833
        %2177 = vmatmul.bf16.gmra.mxu0 %v2167
        %v2178 = vpop.f32.mrf.mxu0
        %v2179 = vadd.f32 0.0, %v2178
        %v2180 = vpop.f32.mrf.mxu0
        %2181 = vdwg.mxu0
        %v2183 = vrot.slane %v2179, 1
        %v2184 = vrot.slane %v2179, 2
        %v2185 = vrot.slane %v2179, 3
        %v2186 = vrot.slane %v2179, 4
        %v2187 = vrot.slane %v2179, 5
        %v2188 = vrot.slane %v2179, 6
        %v2189 = vrot.slane %v2179, 7
        %v2198 = vadd.f32 %v2121, %v2179
        %v2199 = vadd.f32 %v2122, %v2183
        %v2200 = vadd.f32 %v2123, %v2184
        %v2201 = vadd.f32 %v2124, %v2185
        %v2202 = vadd.f32 %v2125, %v2186
        %v2203 = vadd.f32 %v2126, %v2187
        %v2204 = vadd.f32 %v2127, %v2188
        %v2205 = vadd.f32 %v2128, %v2189
        %v2206 = vtanh.pop %v2198
        %v2207 = vtanh.pop %v2199
        %v2208 = vtanh.pop %v2200
        %v2209 = vtanh.pop %v2201
        %v2210 = vtanh.pop %v2202
        %v2211 = vtanh.pop %v2203
        %v2212 = vtanh.pop %v2204
        %v2213 = vtanh.pop %v2205
        %2214 = vst [vmem:[#allocation3 + $0xd] sm:$0x1] %v2206
        %2215 = vst [vmem:[#allocation3 + $0x1d] sm:$0x1] %v2207
        %2216 = vst [vmem:[#allocation3 + $0x2d] sm:$0x1] %v2208
        %2217 = vst [vmem:[#allocation3 + $0x3d] sm:$0x1] %v2209
        %2218 = vst [vmem:[#allocation3 + $0x4d] sm:$0x1] %v2210
        %2219 = vst [vmem:[#allocation3 + $0x5d] sm:$0x1] %v2211
        %2220 = vst [vmem:[#allocation3 + $0x6d] sm:$0x1] %v2212
        %2221 = vst [vmem:[#allocation3 + $0x7d] sm:$0x1] %v2213
        %v2222 = vld [vmem:[#allocation3 + $0xe] sm:$0x1]
        %v2223 = vld [vmem:[#allocation3 + $0x1e] sm:$0x1]
        %v2224 = vld [vmem:[#allocation3 + $0x2e] sm:$0x1]
        %v2225 = vld [vmem:[#allocation3 + $0x3e] sm:$0x1]
        %v2226 = vld [vmem:[#allocation3 + $0x4e] sm:$0x1]
        %v2227 = vld [vmem:[#allocation3 + $0x5e] sm:$0x1]
        %v2228 = vld [vmem:[#allocation3 + $0x6e] sm:$0x1]
        %v2229 = vld [vmem:[#allocation3 + $0x7e] sm:$0x1]
        %v2230 = vpack.c.bf16 %v2206, %v2206
        %v2231 = vpack.c.bf16 %v2207, %v2207
        %v2232 = vpack.c.bf16 %v2208, %v2208
        %v2233 = vpack.c.bf16 %v2209, %v2209
        %v2234 = vpack.c.bf16 %v2210, %v2210
        %v2235 = vpack.c.bf16 %v2211, %v2211
        %v2236 = vpack.c.bf16 %v2212, %v2212
        %v2237 = vpack.c.bf16 %v2213, %v2213
        %v2246 = vunpack.c.l.b16 %v2230
        %v2247 = vunpack.c.l.b16 %v2231
        %v2248 = vunpack.c.l.b16 %v2232
        %v2249 = vunpack.c.l.b16 %v2233
        %v2250 = vunpack.c.l.b16 %v2234
        %v2251 = vunpack.c.l.b16 %v2235
        %v2252 = vunpack.c.l.b16 %v2236
        %v2253 = vunpack.c.l.b16 %v2237
        %v2254 = vrot.slane %v2247, 7
        %v2255 = vsel %vm935, %v2254, %v2246
        %v2256 = vrot.slane %v2248, 6
        %v2257 = vsel %vm938, %v2256, %v2255
        %v2258 = vrot.slane %v2249, 5
        %v2259 = vsel %vm941, %v2258, %v2257
        %v2260 = vrot.slane %v2250, 4
        %v2261 = vsel %vm944, %v2260, %v2259
        %v2262 = vrot.slane %v2251, 3
        %v2263 = vsel %vm947, %v2262, %v2261
        %v2264 = vrot.slane %v2252, 2
        %v2265 = vsel %vm950, %v2264, %v2263
        %v2266 = vrot.slane %v2253, 1
        %v2267 = vsel %vm953, %v2266, %v2265
        %v2268 = vpack.c.b16 %v2267, %v2267
        %2270 = vmatpush.bf16.msra.mxu0 %v840
        %2271 = vmatpush.bf16.msra.mxu0 %v839
        %2272 = vmatpush.bf16.msra.mxu0 %v838
        %2273 = vmatpush.bf16.msra.mxu0 %v837
        %2274 = vmatpush.bf16.msra.mxu0 %v836
        %2275 = vmatpush.bf16.msra.mxu0 %v835
        %2276 = vmatpush.bf16.msra.mxu0 %v834
        %2277 = vmatpush.bf16.msra.mxu0 %v833
        %2278 = vmatmul.bf16.gmra.mxu0 %v2268
        %v2279 = vpop.f32.mrf.mxu0
        %v2280 = vadd.f32 0.0, %v2279
        %v2281 = vpop.f32.mrf.mxu0
        %2282 = vdwg.mxu0
        %v2284 = vrot.slane %v2280, 1
        %v2285 = vrot.slane %v2280, 2
        %v2286 = vrot.slane %v2280, 3
        %v2287 = vrot.slane %v2280, 4
        %v2288 = vrot.slane %v2280, 5
        %v2289 = vrot.slane %v2280, 6
        %v2290 = vrot.slane %v2280, 7
        %v2299 = vadd.f32 %v2222, %v2280
        %v2300 = vadd.f32 %v2223, %v2284
        %v2301 = vadd.f32 %v2224, %v2285
        %v2302 = vadd.f32 %v2225, %v2286
        %v2303 = vadd.f32 %v2226, %v2287
        %v2304 = vadd.f32 %v2227, %v2288
        %v2305 = vadd.f32 %v2228, %v2289
        %v2306 = vadd.f32 %v2229, %v2290
        %v2307 = vtanh.pop %v2299
        %v2308 = vtanh.pop %v2300
        %v2309 = vtanh.pop %v2301
        %v2310 = vtanh.pop %v2302
        %v2311 = vtanh.pop %v2303
        %v2312 = vtanh.pop %v2304
        %v2313 = vtanh.pop %v2305
        %v2314 = vtanh.pop %v2306
        %2315 = vst [vmem:[#allocation3 + $0xe] sm:$0x1] %v2307
        %2316 = vst [vmem:[#allocation3 + $0x1e] sm:$0x1] %v2308
        %2317 = vst [vmem:[#allocation3 + $0x2e] sm:$0x1] %v2309
        %2318 = vst [vmem:[#allocation3 + $0x3e] sm:$0x1] %v2310
        %2319 = vst [vmem:[#allocation3 + $0x4e] sm:$0x1] %v2311
        %2320 = vst [vmem:[#allocation3 + $0x5e] sm:$0x1] %v2312
        %2321 = vst [vmem:[#allocation3 + $0x6e] sm:$0x1] %v2313
        %2322 = vst [vmem:[#allocation3 + $0x7e] sm:$0x1] %v2314
        %v2323 = vld [vmem:[#allocation3 + $0xf] sm:$0x1]
        %v2324 = vld [vmem:[#allocation3 + $0x1f] sm:$0x1]
        %v2325 = vld [vmem:[#allocation3 + $0x2f] sm:$0x1]
        %v2326 = vld [vmem:[#allocation3 + $0x3f] sm:$0x1]
        %v2327 = vld [vmem:[#allocation3 + $0x4f] sm:$0x1]
        %v2328 = vld [vmem:[#allocation3 + $0x5f] sm:$0x1]
        %v2329 = vld [vmem:[#allocation3 + $0x6f] sm:$0x1]
        %v2330 = vld [vmem:[#allocation3 + $0x7f] sm:$0x1]
        %v2331 = vpack.c.bf16 %v2307, %v2307
        %v2332 = vpack.c.bf16 %v2308, %v2308
        %v2333 = vpack.c.bf16 %v2309, %v2309
        %v2334 = vpack.c.bf16 %v2310, %v2310
        %v2335 = vpack.c.bf16 %v2311, %v2311
        %v2336 = vpack.c.bf16 %v2312, %v2312
        %v2337 = vpack.c.bf16 %v2313, %v2313
        %v2338 = vpack.c.bf16 %v2314, %v2314
        %v2347 = vunpack.c.l.b16 %v2331
        %v2348 = vunpack.c.l.b16 %v2332
        %v2349 = vunpack.c.l.b16 %v2333
        %v2350 = vunpack.c.l.b16 %v2334
        %v2351 = vunpack.c.l.b16 %v2335
        %v2352 = vunpack.c.l.b16 %v2336
        %v2353 = vunpack.c.l.b16 %v2337
        %v2354 = vunpack.c.l.b16 %v2338
        %v2355 = vrot.slane %v2348, 7
        %v2356 = vsel %vm935, %v2355, %v2347
        %v2357 = vrot.slane %v2349, 6
        %v2358 = vsel %vm938, %v2357, %v2356
        %v2359 = vrot.slane %v2350, 5
        %v2360 = vsel %vm941, %v2359, %v2358
        %v2361 = vrot.slane %v2351, 4
        %v2362 = vsel %vm944, %v2361, %v2360
        %v2363 = vrot.slane %v2352, 3
        %v2364 = vsel %vm947, %v2363, %v2362
        %v2365 = vrot.slane %v2353, 2
        %v2366 = vsel %vm950, %v2365, %v2364
        %v2367 = vrot.slane %v2354, 1
        %v2368 = vsel %vm953, %v2367, %v2366
        %v2369 = vpack.c.b16 %v2368, %v2368
        %2371 = vmatpush.bf16.msra.mxu0 %v840
        %2372 = vmatpush.bf16.msra.mxu0 %v839
        %2373 = vmatpush.bf16.msra.mxu0 %v838
        %2374 = vmatpush.bf16.msra.mxu0 %v837
        %2375 = vmatpush.bf16.msra.mxu0 %v836
        %2376 = vmatpush.bf16.msra.mxu0 %v835
        %2377 = vmatpush.bf16.msra.mxu0 %v834
        %2378 = vmatpush.bf16.msra.mxu0 %v833
        %2379 = vmatmul.bf16.gmra.mxu0 %v2369
        %v2380 = vpop.f32.mrf.mxu0
        %v2381 = vadd.f32 0.0, %v2380
        %v2382 = vpop.f32.mrf.mxu0
        %2383 = vdwg.mxu0
        %v2385 = vrot.slane %v2381, 1
        %v2386 = vrot.slane %v2381, 2
        %v2387 = vrot.slane %v2381, 3
        %v2388 = vrot.slane %v2381, 4
        %v2389 = vrot.slane %v2381, 5
        %v2390 = vrot.slane %v2381, 6
        %v2391 = vrot.slane %v2381, 7
        %v2400 = vadd.f32 %v2323, %v2381
        %v2401 = vadd.f32 %v2324, %v2385
        %v2402 = vadd.f32 %v2325, %v2386
        %v2403 = vadd.f32 %v2326, %v2387
        %v2404 = vadd.f32 %v2327, %v2388
        %v2405 = vadd.f32 %v2328, %v2389
        %v2406 = vadd.f32 %v2329, %v2390
        %v2407 = vadd.f32 %v2330, %v2391
        %v2408 = vtanh.pop %v2400
        %v2409 = vtanh.pop %v2401
        %v2410 = vtanh.pop %v2402
        %v2411 = vtanh.pop %v2403
        %v2412 = vtanh.pop %v2404
        %v2413 = vtanh.pop %v2405
        %v2414 = vtanh.pop %v2406
        %v2415 = vtanh.pop %v2407
        %2416 = vst [vmem:[#allocation3 + $0xf] sm:$0x1] %v2408
        %2417 = vst [vmem:[#allocation3 + $0x1f] sm:$0x1] %v2409
        %2418 = vst [vmem:[#allocation3 + $0x2f] sm:$0x1] %v2410
        %2419 = vst [vmem:[#allocation3 + $0x3f] sm:$0x1] %v2411
        %2420 = vst [vmem:[#allocation3 + $0x4f] sm:$0x1] %v2412
        %2421 = vst [vmem:[#allocation3 + $0x5f] sm:$0x1] %v2413
        %2422 = vst [vmem:[#allocation3 + $0x6f] sm:$0x1] %v2414
        %2423 = vst [vmem:[#allocation3 + $0x7f] sm:$0x1] %v2415
        %v2432 = vrot.slane %v2409, 7
        %v2433 = vsel %vm935, %v2432, %v2408
        %v2434 = vrot.slane %v2410, 6
        %v2435 = vsel %vm938, %v2434, %v2433
        %v2436 = vrot.slane %v2411, 5
        %v2437 = vsel %vm941, %v2436, %v2435
        %v2438 = vrot.slane %v2412, 4
        %v2439 = vsel %vm944, %v2438, %v2437
        %v2440 = vrot.slane %v2413, 3
        %v2441 = vsel %vm947, %v2440, %v2439
        %v2442 = vrot.slane %v2414, 2
        %v2443 = vsel %vm950, %v2442, %v2441
        %v2444 = vrot.slane %v2415, 1
        %v2445 = vsel %vm953, %v2444, %v2443
        %2447 = vst [vmem:[#allocation2] sm:$0xff] %v2445
        %2448 = vst [vmem:[%s565] sm:$0xff] %v2445
        %v2449 = vld [vmem:[#allocation3] sm:$0xff]
        %v2450 = vld [vmem:[#allocation3 + $0x8] sm:$0xff]
        %v2451 = vld [vmem:[#allocation3 + $0x10] sm:$0xff]
        %v2452 = vld [vmem:[#allocation3 + $0x18] sm:$0xff]
        %v2453 = vld [vmem:[#allocation3 + $0x20] sm:$0xff]
        %v2454 = vld [vmem:[#allocation3 + $0x28] sm:$0xff]
        %v2455 = vld [vmem:[#allocation3 + $0x30] sm:$0xff]
        %v2456 = vld [vmem:[#allocation3 + $0x38] sm:$0xff]
        %v2457 = vld [vmem:[#allocation3 + $0x40] sm:$0xff]
        %v2458 = vld [vmem:[#allocation3 + $0x48] sm:$0xff]
        %v2459 = vld [vmem:[#allocation3 + $0x50] sm:$0xff]
        %v2460 = vld [vmem:[#allocation3 + $0x58] sm:$0xff]
        %v2461 = vld [vmem:[#allocation3 + $0x60] sm:$0xff]
        %v2462 = vld [vmem:[#allocation3 + $0x68] sm:$0xff]
        %v2463 = vld [vmem:[#allocation3 + $0x70] sm:$0xff]
        %v2464 = vld [vmem:[#allocation3 + $0x78] sm:$0xff]
        %v2465 = vld [vmem:[%s490] sm:$0xf]
        %v2466 = vld [vmem:[%s490 + $0x4] sm:$0xf]
        %v2467 = vld [vmem:[%s490 + $0x8] sm:$0xf]
        %v2468 = vld [vmem:[%s490 + $0xc] sm:$0xf]
        %v2469 = vld [vmem:[%s490 + $0x10] sm:$0xf]
        %v2470 = vld [vmem:[%s490 + $0x14] sm:$0xf]
        %v2471 = vld [vmem:[%s490 + $0x18] sm:$0xf]
        %v2472 = vld [vmem:[%s490 + $0x1c] sm:$0xf]
        %v2473 = vld [vmem:[%s490 + $0x20] sm:$0xf]
        %v2474 = vld [vmem:[%s490 + $0x24] sm:$0xf]
        %v2475 = vld [vmem:[%s490 + $0x28] sm:$0xf]
        %v2476 = vld [vmem:[%s490 + $0x2c] sm:$0xf]
        %v2477 = vld [vmem:[%s490 + $0x30] sm:$0xf]
        %v2478 = vld [vmem:[%s490 + $0x34] sm:$0xf]
        %v2479 = vld [vmem:[%s490 + $0x38] sm:$0xf]
        %v2480 = vld [vmem:[%s490 + $0x3c] sm:$0xf]
        %v2481 = vunpack.c.l.bf16 %v2465
        %v2482 = vunpack.c.l.bf16 %v2466
        %v2483 = vunpack.c.l.bf16 %v2467
        %v2484 = vunpack.c.l.bf16 %v2468
        %v2485 = vunpack.c.l.bf16 %v2469
        %v2486 = vunpack.c.l.bf16 %v2470
        %v2487 = vunpack.c.l.bf16 %v2471
        %v2488 = vunpack.c.l.bf16 %v2472
        %v2489 = vunpack.c.l.bf16 %v2473
        %v2490 = vunpack.c.l.bf16 %v2474
        %v2491 = vunpack.c.l.bf16 %v2475
        %v2492 = vunpack.c.l.bf16 %v2476
        %v2493 = vunpack.c.l.bf16 %v2477
        %v2494 = vunpack.c.l.bf16 %v2478
        %v2495 = vunpack.c.l.bf16 %v2479
        %v2496 = vunpack.c.l.bf16 %v2480
        %v2497 = vmul.f32 %v2449, %v2481
        %v2498 = vmul.f32 %v2450, %v2482
        %v2499 = vmul.f32 %v2451, %v2483
        %v2500 = vmul.f32 %v2452, %v2484
        %v2501 = vmul.f32 %v2453, %v2485
        %v2502 = vmul.f32 %v2454, %v2486
        %v2503 = vmul.f32 %v2455, %v2487
        %v2504 = vmul.f32 %v2456, %v2488
        %v2505 = vmul.f32 %v2457, %v2489
        %v2506 = vmul.f32 %v2458, %v2490
        %v2507 = vmul.f32 %v2459, %v2491
        %v2508 = vmul.f32 %v2460, %v2492
        %v2509 = vmul.f32 %v2461, %v2493
        %v2510 = vmul.f32 %v2462, %v2494
        %v2511 = vmul.f32 %v2463, %v2495
        %v2512 = vmul.f32 %v2464, %v2496
        %v2513 = vpack.c.bf16 %v2498, %v2497
        %v2514 = vpack.c.bf16 %v2500, %v2499
        %v2515 = vpack.c.bf16 %v2502, %v2501
        %v2516 = vpack.c.bf16 %v2504, %v2503
        %v2517 = vpack.c.bf16 %v2506, %v2505
        %v2518 = vpack.c.bf16 %v2508, %v2507
        %v2519 = vpack.c.bf16 %v2510, %v2509
        %v2520 = vpack.c.bf16 %v2512, %v2511
        %v2521 = vld [vmem:[#allocation13] sm:$0xf]
        %v2522 = vld [vmem:[#allocation13 + $0x4] sm:$0xf]
        %v2523 = vld [vmem:[#allocation13 + $0x8] sm:$0xf]
        %v2524 = vld [vmem:[#allocation13 + $0xc] sm:$0xf]
        %v2525 = vld [vmem:[#allocation13 + $0x10] sm:$0xf]
        %v2526 = vld [vmem:[#allocation13 + $0x14] sm:$0xf]
        %v2527 = vld [vmem:[#allocation13 + $0x18] sm:$0xf]
        %v2528 = vld [vmem:[#allocation13 + $0x1c] sm:$0xf]
        %v2529 = vld [vmem:[#allocation13 + $0x20] sm:$0xf]
        %v2530 = vld [vmem:[#allocation13 + $0x24] sm:$0xf]
        %v2531 = vld [vmem:[#allocation13 + $0x28] sm:$0xf]
        %v2532 = vld [vmem:[#allocation13 + $0x2c] sm:$0xf]
        %v2533 = vld [vmem:[#allocation13 + $0x30] sm:$0xf]
        %v2534 = vld [vmem:[#allocation13 + $0x34] sm:$0xf]
        %v2535 = vld [vmem:[#allocation13 + $0x38] sm:$0xf]
        %v2536 = vld [vmem:[#allocation13 + $0x3c] sm:$0xf]
        %v2537 = vld [vmem:[%s7] sm:$0x1]
        %v2539 = vperm.slane %v2537, 0
        %v2557 = vunpack.c.l.b16 %v2521
        %v2558 = vunpack.c.l.b16 %v2522
        %v2559 = vunpack.c.l.b16 %v2523
        %v2560 = vunpack.c.l.b16 %v2524
        %v2561 = vunpack.c.l.b16 %v2525
        %v2562 = vunpack.c.l.b16 %v2526
        %v2563 = vunpack.c.l.b16 %v2527
        %v2564 = vunpack.c.l.b16 %v2528
        %v2565 = vunpack.c.l.b16 %v2529
        %v2566 = vunpack.c.l.b16 %v2530
        %v2567 = vunpack.c.l.b16 %v2531
        %v2568 = vunpack.c.l.b16 %v2532
        %v2569 = vunpack.c.l.b16 %v2533
        %v2570 = vunpack.c.l.b16 %v2534
        %v2571 = vunpack.c.l.b16 %v2535
        %v2572 = vunpack.c.l.b16 %v2536
        %v2573 = vpack.c.b16 %v2558, %v2557
        %v2574 = vpack.c.b16 %v2560, %v2559
        %v2575 = vpack.c.b16 %v2562, %v2561
        %v2576 = vpack.c.b16 %v2564, %v2563
        %v2577 = vpack.c.b16 %v2566, %v2565
        %v2578 = vpack.c.b16 %v2568, %v2567
        %v2579 = vpack.c.b16 %v2570, %v2569
        %v2580 = vpack.c.b16 %v2572, %v2571
        %2589 = vmatpush.bf16.msra.mxu0 %v2580
        %2590 = vmatpush.bf16.msra.mxu0 %v2579
        %2591 = vmatpush.bf16.msra.mxu0 %v2578
        %2592 = vmatpush.bf16.msra.mxu0 %v2577
        %2593 = vmatpush.bf16.msra.mxu0 %v2576
        %2594 = vmatpush.bf16.msra.mxu0 %v2575
        %2595 = vmatpush.bf16.msra.mxu0 %v2574
        %2596 = vmatpush.bf16.msra.mxu0 %v2573
        %2597 = vmatmul.bf16.gmra.mxu0 %v2513
        %v2598 = vpop.f32.mrf.mxu0
        %v2599 = vadd.f32 %v2539, %v2598
        %v2600 = vpop.f32.mrf.mxu0
        %v2601 = vadd.f32 %v2539, %v2600
        %2602 = vmatmul.bf16.gmra.mxu0 %v2514
        %v2603 = vpop.f32.mrf.mxu0
        %v2604 = vadd.f32 %v2539, %v2603
        %v2605 = vpop.f32.mrf.mxu0
        %v2606 = vadd.f32 %v2539, %v2605
        %2607 = vmatmul.bf16.gmra.mxu0 %v2515
        %v2608 = vpop.f32.mrf.mxu0
        %v2609 = vadd.f32 %v2539, %v2608
        %v2610 = vpop.f32.mrf.mxu0
        %v2611 = vadd.f32 %v2539, %v2610
        %2612 = vmatmul.bf16.gmra.mxu0 %v2516
        %v2613 = vpop.f32.mrf.mxu0
        %v2614 = vadd.f32 %v2539, %v2613
        %v2615 = vpop.f32.mrf.mxu0
        %v2616 = vadd.f32 %v2539, %v2615
        %2617 = vmatmul.bf16.gmra.mxu0 %v2517
        %v2618 = vpop.f32.mrf.mxu0
        %v2619 = vadd.f32 %v2539, %v2618
        %v2620 = vpop.f32.mrf.mxu0
        %v2621 = vadd.f32 %v2539, %v2620
        %2622 = vmatmul.bf16.gmra.mxu0 %v2518
        %v2623 = vpop.f32.mrf.mxu0
        %v2624 = vadd.f32 %v2539, %v2623
        %v2625 = vpop.f32.mrf.mxu0
        %v2626 = vadd.f32 %v2539, %v2625
        %2627 = vmatmul.bf16.gmra.mxu0 %v2519
        %v2628 = vpop.f32.mrf.mxu0
        %v2629 = vadd.f32 %v2539, %v2628
        %v2630 = vpop.f32.mrf.mxu0
        %v2631 = vadd.f32 %v2539, %v2630
        %2632 = vmatmul.bf16.gmra.mxu0 %v2520
        %v2633 = vpop.f32.mrf.mxu0
        %v2634 = vadd.f32 %v2539, %v2633
        %v2635 = vpop.f32.mrf.mxu0
        %v2636 = vadd.f32 %v2539, %v2635
        %2637 = vdwg.mxu0
        %2638 = vst [vmem:[%s558] sm:$0xff] %v2599
        %2639 = vst [vmem:[%s558 + $0x8] sm:$0xff] %v2601
        %2640 = vst [vmem:[%s558 + $0x10] sm:$0xff] %v2604
        %2641 = vst [vmem:[%s558 + $0x18] sm:$0xff] %v2606
        %2642 = vst [vmem:[%s558 + $0x20] sm:$0xff] %v2609
        %2643 = vst [vmem:[%s558 + $0x28] sm:$0xff] %v2611
        %2644 = vst [vmem:[%s558 + $0x30] sm:$0xff] %v2614
        %2645 = vst [vmem:[%s558 + $0x38] sm:$0xff] %v2616
        %2646 = vst [vmem:[%s558 + $0x40] sm:$0xff] %v2619
        %2647 = vst [vmem:[%s558 + $0x48] sm:$0xff] %v2621
        %2648 = vst [vmem:[%s558 + $0x50] sm:$0xff] %v2624
        %2649 = vst [vmem:[%s558 + $0x58] sm:$0xff] %v2626
        %2650 = vst [vmem:[%s558 + $0x60] sm:$0xff] %v2629
        %2651 = vst [vmem:[%s558 + $0x68] sm:$0xff] %v2631
        %2652 = vst [vmem:[%s558 + $0x70] sm:$0xff] %v2634
        %2653 = vst [vmem:[%s558 + $0x78] sm:$0xff] %v2636
        %s2654 = sand.u32 %s244, 1
        %s2655 = scalar_lea.sflag [#allocation6], %s2654
        %s2656 = sand.u32 %s244, 1
        %s2657 = smul.addr %s2656, 128
        %s2658 = scalar_lea.vmem [#allocation15], %s2657
        %s2659 = sand.u32 %s270, 1
        %s2660 = scalar_lea.sflag [#allocation17], %s2659
        %s2661 = sand.u32 %s270, 1
        %s2662 = smul.addr %s2661, 8
        %s2663 = scalar_lea.vmem [#allocation16], %s2662
        // Predicated region
        $region81: #{tpu_custom_call.1} parent=51 // pred_check
          %p2664 = pneg %p254
        $region82: #{tpu_custom_call.1} parent=51 // pred_check_branch
          %2666 = sbr.rel (%p2664) target = $region84
        $region83: #{tpu_custom_call.1} parent=51 // pred_region
          #allocation23 [shape = 'u32[6]{0}', space=smem, size = 0x18, scoped, tag = 'DMA stride descriptor']
          %s2667 = smul.u32 8, %s39
          %s2668 = smul.u32 2, %s40
          %2670 = vsyncadd %s2655, 0
          %s2671 = smul.addr %s2667, 6
          %s2672 = sadd.s32 %s2668, %s2671
          %s2673 = smul.addr %s2672, 8
          %s2674 = scalar_lea.hbm %s8, %s2673
          %s2676 = sshll.u32 1, 14
          %s2677 = sxor.u32 4294967295, %s2676
          %s2680 = sshll.u32 7, 18
          %s2681 = sxor.u32 4294967295, %s2680
          %s2682 = sand.u32 0, %s2681
          %s2684 = sor.u32 %s2682, 0
          %s2685 = sshll.u32 %s2658, 4
          %s2686 = int_to_ptr.vmem [resolvable:$true] %s2685
          %s2687 = sshll.u32 %s2674, 4
          %s2688 = int_to_ptr.hbm [resolvable:$true] %s2687
          %2694 = sst [smem:[#allocation23]] 256
          %s2695 = scalar_lea.smem [#allocation23], 1
          %2696 = sst [smem:[%s2695]] 768
          %s2697 = scalar_lea.smem [#allocation23], 2
          %2698 = sst [smem:[%s2697]] 2
          %s2699 = scalar_lea.smem [#allocation23], 3
          %2700 = sst [smem:[%s2699]] 128
          %s2701 = scalar_lea.smem [#allocation23], 4
          %2702 = sst [smem:[%s2701]] 128
          %s2703 = scalar_lea.smem [#allocation23], 5
          %2704 = sst [smem:[%s2703]] 8
          %2706 = dma.general %s2686, 2048, %s2688, %s2655, [#allocation22], [#allocation23], %s2684, 0
        $region84: #{tpu_custom_call.1} parent=51 // pred_fallthru
          _
        // Predicated region
        $region85: #{tpu_custom_call.1} parent=51 // pred_check
          %p2707 = pneg %p280
        $region86: #{tpu_custom_call.1} parent=51 // pred_check_branch
          %2709 = sbr.rel (%p2707) target = $region88
        $region87: #{tpu_custom_call.1} parent=51 // pred_region
          %2711 = vsyncadd %s2660, 0
          %s2712 = smul.addr %s39, 8
          %s2713 = scalar_lea.hbm %s9, %s2712
          %s2715 = sshll.u32 %s2663, 4
          %s2716 = int_to_ptr.vmem [resolvable:$true] %s2715
          %s2717 = sshll.u32 %s2713, 4
          %s2718 = int_to_ptr.hbm [resolvable:$true] %s2717
          %2720 = dma.vmem_to_hbm [thread:$0]  %s2716, 128, %s2718, %s2660
        $region88: #{tpu_custom_call.1} parent=51 // pred_fallthru
          _
      $region52: #{tpu_custom_call.1} parent=5 // pred_fallthru
        _
      %p2721 = scmp.le.s32.totalorder 2, %s30
      // Predicated region
      $region89: #{tpu_custom_call.1} parent=5 // pred_check
        %p2722 = pneg %p2721
      $region90: #{tpu_custom_call.1} parent=5 // pred_check_branch
        %2724 = sbr.rel (%p2722) target = $region92
      $region91: #{tpu_custom_call.1} parent=5 // pred_region
        %s2725 = ssub.s32 %s30, 2
        // Predicated region
        $region93: #{tpu_custom_call.1} parent=91 // pred_check
          %p2726 = pneg %p260
        $region94: #{tpu_custom_call.1} parent=91 // pred_check_branch
          %2728 = sbr.rel (%p2726) target = $region96
        $region95: #{tpu_custom_call.1} parent=91 // pred_region
          %s2729 = sand.u32 %s245, 1
          %s2730 = scalar_lea.sflag [#allocation6], %s2729
          %s2731 = sand.u32 %s245, 1
          %s2732 = smul.addr %s2731, 128
          %s2733 = scalar_lea.vmem [#allocation15], %s2732
          %2735 = dma.done %s2730, 2048
        $region96: #{tpu_custom_call.1} parent=91 // pred_fallthru
          _
        // Predicated region
        $region97: #{tpu_custom_call.1} parent=91 // pred_check
          %p2736 = pneg %p286
        $region98: #{tpu_custom_call.1} parent=91 // pred_check_branch
          %2738 = sbr.rel (%p2736) target = $region100
        $region99: #{tpu_custom_call.1} parent=91 // pred_region
          %s2739 = sand.u32 %s271, 1
          %s2740 = scalar_lea.sflag [#allocation17], %s2739
          %s2741 = sand.u32 %s271, 1
          %s2742 = smul.addr %s2741, 8
          %s2743 = scalar_lea.vmem [#allocation16], %s2742
          %2745 = dma.done %s2740, 128
        $region100: #{tpu_custom_call.1} parent=91 // pred_fallthru
          _
      $region92: #{tpu_custom_call.1} parent=5 // pred_fallthru
        _
    $region6: #{tpu_custom_call.1} parent=1 // loop_footer
      %s34 = sadd.s32 1, %s30
    $region7: #{tpu_custom_call.1} parent=1 // loop_footer_branch
      %29 = sbr.rel target = $region3
    $region8: #{tpu_custom_call.1} parent=1 // loop_exit
      _
    %2746 = vsyncpa [#allocation5], 1
    %s2747 = scalar_lea.sflag [#allocation5], 1
    %2748 = vsyncpa %s2747, 1
    %2749 = vsyncpa [#allocation8], 1
    %s2750 = scalar_lea.sflag [#allocation8], 1
    %2751 = vsyncpa %s2750, 1
    %2752 = vsyncpa [#allocation11], 1
    %2753 = vsyncpa [#allocation14], 1
    %2754 = vsyncpa [#allocation6], 1
    %s2755 = scalar_lea.sflag [#allocation6], 1
    %2756 = vsyncpa %s2755, 1
    %2757 = vsyncpa [#allocation17], 1
    %s2758 = scalar_lea.sflag [#allocation17], 1
    %2759 = vsyncpa %s2758, 1

</llo_original>
